<compile_context>
chip_gen: v7x
topology: tpu7x:2x2x1
jax: 0.10.0
libtpu: 0.0.40
codegen_flags: <defaults>
</compile_context>

<pallas_src>
import jax
import jax.numpy as jnp
import numpy as np
from jax import lax
from jax.experimental import pallas as pl
from jax.experimental.pallas import tpu as pltpu


# ----------------------------------------------------------------------------
# Fused attribute-assembly kernel
# ----------------------------------------------------------------------------
def _attr_kernel(agent_feat_ref, agent_st_ref, map_feat_ref, map_type_ref,
                 tl_feat_ref, agent_out_ref, map_out_ref, tl_out_ref):
    odt = agent_out_ref.dtype

    # ---------------- agents: (Sb, A, T, 15 + T) ----------------
    sb, a, t, _ = agent_feat_ref.shape
    feat = agent_feat_ref[...]                    # pos(2)|yaw(1)|vel(2)|spd|yaw_rate|acc
    agent_out_ref[:, :, :, 0:2] = feat[:, :, :, 0:2].astype(odt)          # x, y
    yaw = feat[:, :, :, 2:3]
    agent_out_ref[:, :, :, 2:3] = jnp.cos(yaw).astype(odt)
    agent_out_ref[:, :, :, 3:4] = jnp.sin(yaw).astype(odt)
    agent_out_ref[:, :, :, 4:9] = feat[:, :, :, 3:8].astype(odt)          # vel, spd, yaw_rate, acc
    st = agent_st_ref[...]                        # (Sb, A, 1, 6) = size(3)|type(3)
    c_st = agent_st_ref.shape[-1]
    agent_out_ref[:, :, :, 9:9 + c_st] = jnp.broadcast_to(
        st, (sb, a, t, c_st)).astype(odt)
    base = 9 + c_st
    row = lax.broadcasted_iota(jnp.int32, (sb, a, t, t), 2)
    col = lax.broadcasted_iota(jnp.int32, (sb, a, t, t), 3)
    agent_out_ref[:, :, :, base:base + t] = (row == col).astype(odt)      # history-step OHE

    # ---------------- map polylines: (Sb, P, N, 4 + 11 + N) ----------------
    sb, p, n, _ = map_feat_ref.shape
    c_type = map_type_ref.shape[-1]
    map_out_ref[:, :, :, 0:4] = map_feat_ref[...].astype(odt)             # x, y, dx, dy
    mt = map_type_ref[...]                        # (Sb, P, 1, 11)
    map_out_ref[:, :, :, 4:4 + c_type] = jnp.broadcast_to(
        mt, (sb, p, n, c_type)).astype(odt)
    base = 4 + c_type
    row = lax.broadcasted_iota(jnp.int32, (sb, p, n, n), 2)
    col = lax.broadcasted_iota(jnp.int32, (sb, p, n, n), 3)
    map_out_ref[:, :, :, base:base + n] = (row == col).astype(odt)        # pl-node OHE

    # ---------------- traffic lights: (Sb, T, L, 9 + T) ----------------
    sb, t2, l, c_tl = tl_feat_ref.shape
    tl_out_ref[:, :, :, 0:c_tl] = tl_feat_ref[...].astype(odt)            # x, y, dx, dy, state(5)
    row = lax.broadcasted_iota(jnp.int32, (sb, t2, l, t2), 1)
    col = lax.broadcasted_iota(jnp.int32, (sb, t2, l, t2), 3)
    tl_out_ref[:, :, :, c_tl:c_tl + t2] = (row == col).astype(odt)        # history-step OHE


# ----------------------------------------------------------------------------
# Tiling helpers
# ----------------------------------------------------------------------------
def _padded_tile_bytes(block_shape, dtype=jnp.float32):
    """Approximate VMEM footprint of one block (last two dims pad to (8, 128))."""
    itemsize = np.dtype(dtype).itemsize
    shape = tuple(int(d) for d in block_shape)
    if len(shape) < 2:
        shape = (1,) * (2 - len(shape)) + shape
    lead = 1
    for d in shape[:-2]:
        lead *= d
    sub = -(-shape[-2] // 8) * 8
    lane = -(-shape[-1] // 128) * 128
    return lead * sub * lane * itemsize


_VMEM_BLOCK_BUDGET = 6 * 1024 * 1024   # single-buffer bytes for all refs of one grid step


def _choose_scenes_per_block(n_scene, per_scene_block_shapes):
    per_scene = sum(_padded_tile_bytes(s) for s in per_scene_block_shapes)
    best = 1
    for d in range(1, n_scene + 1):
        if n_scene % d:
            continue
        if d * per_scene > _VMEM_BLOCK_BUDGET:
            continue
        # keep at least 2 grid steps so both v7x TensorCores have work
        if n_scene > 1 and n_scene // d < 2:
            continue
        best = d
    return best


def _compute_attrs(agent_feat, agent_st, map_feat, map_type, tl_feat,
                   out_dtype=jnp.float32):
    s, a, t, _ = agent_feat.shape
    _, p, n, _ = map_feat.shape
    l = tl_feat.shape[2]
    c_st = agent_st.shape[-1]
    c_type = map_type.shape[-1]
    c_tl = tl_feat.shape[-1]

    agent_dim = 9 + c_st + t          # pose(4)+vel(2)+spd+yr+acc + size/type(6) + T
    map_dim = 4 + c_type + n          # pose(4) + type(11) + N
    tl_dim = c_tl + t                 # pose(4)+state(5) + T

    out_shapes = (
        jax.ShapeDtypeStruct((s, a, t, agent_dim), out_dtype),
        jax.ShapeDtypeStruct((s, p, n, map_dim), out_dtype),
        jax.ShapeDtypeStruct((s, t, l, tl_dim), out_dtype),
    )

    in_arrays = (agent_feat, agent_st, map_feat, map_type, tl_feat)
    per_scene_shapes = [(1,) + tuple(x.shape[1:]) for x in in_arrays] \
                     + [(1,) + tuple(o.shape[1:]) for o in out_shapes]
    sb = _choose_scenes_per_block(s, per_scene_shapes)

    def _spec(shape):
        nd = len(shape)
        block = (sb,) + tuple(shape[1:])
        return pl.BlockSpec(block, lambda i, _nd=nd: (i,) + (0,) * (_nd - 1))

    in_specs = [_spec(x.shape) for x in in_arrays]
    out_specs = tuple(_spec(o.shape) for o in out_shapes)

    block_bytes = sum(_padded_tile_bytes((sb,) + tuple(x.shape[1:]), x.dtype)
                      for x in in_arrays)
    block_bytes += sum(_padded_tile_bytes((sb,) + tuple(o.shape[1:]), o.dtype)
                       for o in out_shapes)
    # double-buffered blocks + headroom, kept under the v7x physical budget
    vmem_limit = int(min(56 * 2**20, max(16 * 2**20, 2 * block_bytes + 4 * 2**20)))

    in_bytes = sum(int(x.size) * x.dtype.itemsize for x in in_arrays)
    out_elems = sum(int(np.prod(o.shape)) for o in out_shapes)
    out_bytes = sum(int(np.prod(o.shape)) * np.dtype(o.dtype).itemsize for o in out_shapes)
    cost = pl.CostEstimate(flops=out_elems,
                           transcendentals=2 * s * a * t,
                           bytes_accessed=in_bytes + out_bytes)

    return pl.pallas_call(
        _attr_kernel,
        out_shape=out_shapes,
        grid=(s // sb,),
        in_specs=in_specs,
        out_specs=out_specs,
        compiler_params=pltpu.CompilerParams(
            dimension_semantics=("parallel",),
            vmem_limit_bytes=vmem_limit),
        cost_estimate=cost,
    )(*in_arrays)


@jax.jit
def _pack_and_compute(agent_pos, agent_yaw, agent_vel, agent_spd, agent_yaw_rate,
                      agent_acc, agent_size, agent_type, map_pos, map_dir,
                      map_type, tl_pos, tl_dir, tl_state):
    f32 = jnp.float32
    # Few, wide input streams for the kernel (one cheap XLA concat per family).
    agent_feat = jnp.concatenate(
        [agent_pos, agent_yaw, agent_vel, agent_spd, agent_yaw_rate, agent_acc],
        axis=-1).astype(f32)                                       # (S, A, T, 8)
    agent_st = jnp.concatenate([agent_size, agent_type],
                               axis=-1).astype(f32)[:, :, None, :]  # (S, A, 1, 6)
    map_feat = jnp.concatenate([map_pos, map_dir], axis=-1).astype(f32)  # (S, P, N, 4)
    map_type4 = map_type.astype(f32)[:, :, None, :]                 # (S, P, 1, 11)
    tl_feat = jnp.concatenate([tl_pos, tl_dir, tl_state],
                              axis=-1).astype(f32)                  # (S, T, L, 9)
    return _compute_attrs(agent_feat, agent_st, map_feat, map_type4, tl_feat)


# ----------------------------------------------------------------------------
# SceneCentricGlobal forward (inference; pl_aggr=False, add_ohe=True,
# use_current_tl=False, pose_pe='xy_dir')
# ----------------------------------------------------------------------------
class SceneCentricGlobal:
    def __init__(self, time_step_current, n_pl_node):
        self.n_step_hist = time_step_current + 1
        self.n_pl_node = n_pl_node
        self.model_kwargs = {
            "agent_attr_dim": 4 + 1 + 2 + 1 + 1 + 3 + 3 + self.n_step_hist,
            "map_attr_dim": 4 + 11 + self.n_pl_node,
            "tl_attr_dim": 4 + 5 + self.n_step_hist,
            "n_step_hist": self.n_step_hist,
            "n_pl_node": self.n_pl_node,
            "use_current_tl": False,
            "pl_aggr": False,
        }

    def __call__(self, batch):
        batch = dict(batch)
        # passthroughs
        batch["input/agent_type"] = batch["sc/agent_type"]
        batch["input/agent_valid"] = batch["sc/agent_valid"]
        batch["input/tl_valid"] = batch["sc/tl_valid"]
        batch["input/map_valid"] = batch["sc/map_valid"]
        # TODO(synk): training-time Bernoulli history dropout on the valid masks
        # (torch.bernoulli) is a training-only path and is not implemented here.
        batch["input/agent_pos"] = batch["ref/pos"][:, :, 0, :]
        batch["input/map_pos"] = batch["sc/map_pos"][:, :, 0]
        batch["input/tl_pos"] = batch["sc/tl_pos"]

        agent_attr, map_attr, tl_attr = _pack_and_compute(
            batch["sc/agent_pos"], batch["sc/agent_yaw_bbox"],
            batch["sc/agent_vel"], batch["sc/agent_spd"],
            batch["sc/agent_yaw_rate"], batch["sc/agent_acc"],
            batch["sc/agent_size"], batch["sc/agent_type"],
            batch["sc/map_pos"], batch["sc/map_dir"], batch["sc/map_type"],
            batch["sc/tl_pos"], batch["sc/tl_dir"], batch["sc/tl_state"])

        batch["input/agent_attr"] = agent_attr
        batch["input/map_attr"] = map_attr
        batch["input/tl_attr"] = tl_attr
        return batch


# ----------------------------------------------------------------------------
# pure-JAX reference (for correctness check only)
# ----------------------------------------------------------------------------
def _ref_forward(batch):
    S, A, T, _ = batch["sc/agent_pos"].shape
    P, N = batch["sc/map_valid"].shape[1:]
    L = batch["sc/tl_valid"].shape[-1]
    step_ohe = jnp.eye(T, dtype=jnp.float32)
    node_ohe = jnp.eye(N, dtype=jnp.float32)
    yaw = batch["sc/agent_yaw_bbox"]
    agent_attr = jnp.concatenate(
        [batch["sc/agent_pos"], jnp.cos(yaw), jnp.sin(yaw),
         batch["sc/agent_vel"], batch["sc/agent_spd"],
         batch["sc/agent_yaw_rate"], batch["sc/agent_acc"],
         jnp.broadcast_to(batch["sc/agent_size"][:, :, None, :], (S, A, T, 3)),
         jnp.broadcast_to(batch["sc/agent_type"][:, :, None, :], (S, A, T, 3)),
         jnp.broadcast_to(step_ohe[None, None], (S, A, T, T))], axis=-1)
    map_attr = jnp.concatenate(
        [batch["sc/map_pos"], batch["sc/map_dir"],
         jnp.broadcast_to(batch["sc/map_type"][:, :, None, :], (S, P, N, 11)),
         jnp.broadcast_to(node_ohe[None, None], (S, P, N, N))], axis=-1)
    tl_attr = jnp.concatenate(
        [batch["sc/tl_pos"], batch["sc/tl_dir"], batch["sc/tl_state"],
         jnp.broadcast_to(step_ohe[None, :, None, :], (S, T, L, T))], axis=-1)
    return agent_attr, map_attr, tl_attr


# ----------------------------------------------------------------------------
if __name__ == "__main__":
    key = jax.random.PRNGKey(0)
    n_scene, n_agent, n_step_hist = 2, 4, 8
    n_pl, n_pl_node, n_tl = 6, 16, 5

    ks = jax.random.split(key, 20)
    f32 = jnp.float32
    batch = {
        "ref/pos": jax.random.normal(ks[0], (n_scene, n_agent, 1, 2), f32),
        "sc/agent_valid": jax.random.bernoulli(ks[1], 0.8, (n_scene, n_agent, n_step_hist)),
        "sc/agent_pos": jax.random.normal(ks[2], (n_scene, n_agent, n_step_hist, 2), f32),
        "sc/agent_vel": jax.random.normal(ks[3], (n_scene, n_agent, n_step_hist, 2), f32),
        "sc/agent_spd": jax.random.normal(ks[4], (n_scene, n_agent, n_step_hist, 1), f32),
        "sc/agent_acc": jax.random.normal(ks[5], (n_scene, n_agent, n_step_hist, 1), f32),
        "sc/agent_yaw_bbox": jax.random.normal(ks[6], (n_scene, n_agent, n_step_hist, 1), f32),
        "sc/agent_yaw_rate": jax.random.normal(ks[7], (n_scene, n_agent, n_step_hist, 1), f32),
        "sc/agent_type": jax.random.bernoulli(ks[8], 0.5, (n_scene, n_agent, 3)).astype(f32),
        "sc/agent_role": jax.random.bernoulli(ks[9], 0.5, (n_scene, n_agent, 3)).astype(f32),
        "sc/agent_size": jax.random.normal(ks[10], (n_scene, n_agent, 3), f32),
        "sc/map_valid": jax.random.bernoulli(ks[11], 0.8, (n_scene, n_pl, n_pl_node)),
        "sc/map_type": jax.random.bernoulli(ks[12], 0.2, (n_scene, n_pl, 11)).astype(f32),
        "sc/map_pos": jax.random.normal(ks[13], (n_scene, n_pl, n_pl_node, 2), f32),
        "sc/map_dir": jax.random.normal(ks[14], (n_scene, n_pl, n_pl_node, 2), f32),
        "sc/tl_valid": jax.random.bernoulli(ks[15], 0.8, (n_scene, n_step_hist, n_tl)),
        "sc/tl_state": jax.random.bernoulli(ks[16], 0.3, (n_scene, n_step_hist, n_tl, 5)).astype(f32),
        "sc/tl_pos": jax.random.normal(ks[17], (n_scene, n_step_hist, n_tl, 2), f32),
        "sc/tl_dir": jax.random.normal(ks[18], (n_scene, n_step_hist, n_tl, 2), f32),
    }

    model = SceneCentricGlobal(time_step_current=n_step_hist - 1, n_pl_node=n_pl_node)
    out = model(batch)
    jax.block_until_ready(out["input/agent_attr"])
    jax.block_until_ready(out["input/map_attr"])
    jax.block_until_ready(out["input/tl_attr"])

    # shape checks
    kw = model.model_kwargs
    assert out["input/agent_attr"].shape == (n_scene, n_agent, n_step_hist, kw["agent_attr_dim"])
    assert out["input/map_attr"].shape == (n_scene, n_pl, n_pl_node, kw["map_attr_dim"])
    assert out["input/tl_attr"].shape == (n_scene, n_step_hist, n_tl, kw["tl_attr_dim"])
    assert out["input/agent_pos"].shape == (n_scene, n_agent, 2)
    assert out["input/map_pos"].shape == (n_scene, n_pl, 2)

    # numerical check vs pure-JAX reference
    ref_agent, ref_map, ref_tl = _ref_forward(batch)
    np.testing.assert_allclose(np.asarray(out["input/agent_attr"]), np.asarray(ref_agent), rtol=1e-6, atol=1e-6)
    np.testing.assert_allclose(np.asarray(out["input/map_attr"]), np.asarray(ref_map), rtol=1e-6, atol=1e-6)
    np.testing.assert_allclose(np.asarray(out["input/tl_attr"]), np.asarray(ref_tl), rtol=1e-6, atol=1e-6)

    print("KERNEL_OK")
</pallas_src>

<mosaic_0001>
module attributes {stable_mosaic.version = 11 : i64} {
  func.func @_attr_kernel(%arg0: i32, %arg1: memref<1x4x8x8xf32, #tpu.memory_space<vmem>>, %arg2: memref<1x4x1x6xf32, #tpu.memory_space<vmem>>, %arg3: memref<1x6x16x4xf32, #tpu.memory_space<vmem>>, %arg4: memref<1x6x1x11xf32, #tpu.memory_space<vmem>>, %arg5: memref<1x8x5x9xf32, #tpu.memory_space<vmem>>, %arg6: memref<1x4x8x23xf32, #tpu.memory_space<vmem>>, %arg7: memref<1x6x16x31xf32, #tpu.memory_space<vmem>>, %arg8: memref<1x8x5x17xf32, #tpu.memory_space<vmem>>) attributes {dimension_semantics = [#tpu.dimension_semantics<parallel>], iteration_bounds = array<i64: 2>, scalar_prefetch = 0 : i64, scratch_operands = 0 : i64, tpu.core_type = #tpu.core_type<tc>, window_params = [{transform_indices = @transform_0, window_bounds = array<i64: 1, 4, 8, 8>}, {transform_indices = @transform_1, window_bounds = array<i64: 1, 4, 1, 6>}, {transform_indices = @transform_2, window_bounds = array<i64: 1, 6, 16, 4>}, {transform_indices = @transform_3, window_bounds = array<i64: 1, 6, 1, 11>}, {transform_indices = @transform_4, window_bounds = array<i64: 1, 8, 5, 9>}, {transform_indices = @transform_5, window_bounds = array<i64: 1, 4, 8, 23>}, {transform_indices = @transform_6, window_bounds = array<i64: 1, 6, 16, 31>}, {transform_indices = @transform_7, window_bounds = array<i64: 1, 8, 5, 17>}]} {
    %c0 = arith.constant 0 : index
    %c0_0 = arith.constant 0 : index
    %c0_1 = arith.constant 0 : index
    %c0_2 = arith.constant 0 : index
    %0 = vector.load %arg1[%c0, %c0_0, %c0_1, %c0_2] : memref<1x4x8x8xf32, #tpu.memory_space<vmem>>, vector<1x4x8x8xf32>
    %1 = vector.extract_strided_slice %0 {offsets = [0, 0, 0, 0], sizes = [1, 4, 8, 2], strides = [1, 1, 1, 1]} : vector<1x4x8x8xf32> to vector<1x4x8x2xf32>
    %c0_3 = arith.constant 0 : index
    %c0_4 = arith.constant 0 : index
    %c0_5 = arith.constant 0 : index
    %c0_6 = arith.constant 0 : index
    %2 = vector.load %arg6[%c0_3, %c0_4, %c0_5, %c0_6] : memref<1x4x8x23xf32, #tpu.memory_space<vmem>>, vector<1x4x8x2xf32>
    tpu.vector_store %arg6[%c0_3, %c0_4, %c0_5, %c0_6], %1 {strides = array<i32>} : memref<1x4x8x23xf32, #tpu.memory_space<vmem>>, vector<1x4x8x2xf32>,
    %3 = vector.extract_strided_slice %0 {offsets = [0, 0, 0, 2], sizes = [1, 4, 8, 1], strides = [1, 1, 1, 1]} : vector<1x4x8x8xf32> to vector<1x4x8x1xf32>
    %4 = math.cos %3 : vector<1x4x8x1xf32>
    %c0_7 = arith.constant 0 : index
    %c0_8 = arith.constant 0 : index
    %c0_9 = arith.constant 0 : index
    %c2 = arith.constant 2 : index
    %5 = vector.load %arg6[%c0_7, %c0_8, %c0_9, %c2] : memref<1x4x8x23xf32, #tpu.memory_space<vmem>>, vector<1x4x8x1xf32>
    tpu.vector_store %arg6[%c0_7, %c0_8, %c0_9, %c2], %4 {strides = array<i32>} : memref<1x4x8x23xf32, #tpu.memory_space<vmem>>, vector<1x4x8x1xf32>,
    %6 = math.sin %3 : vector<1x4x8x1xf32>
    %c0_10 = arith.constant 0 : index
    %c0_11 = arith.constant 0 : index
    %c0_12 = arith.constant 0 : index
    %c3 = arith.constant 3 : index
    %7 = vector.load %arg6[%c0_10, %c0_11, %c0_12, %c3] : memref<1x4x8x23xf32, #tpu.memory_space<vmem>>, vector<1x4x8x1xf32>
    tpu.vector_store %arg6[%c0_10, %c0_11, %c0_12, %c3], %6 {strides = array<i32>} : memref<1x4x8x23xf32, #tpu.memory_space<vmem>>, vector<1x4x8x1xf32>,
    %8 = vector.extract_strided_slice %0 {offsets = [0, 0, 0, 3], sizes = [1, 4, 8, 5], strides = [1, 1, 1, 1]} : vector<1x4x8x8xf32> to vector<1x4x8x5xf32>
    %c0_13 = arith.constant 0 : index
    %c0_14 = arith.constant 0 : index
    %c0_15 = arith.constant 0 : index
    %c4 = arith.constant 4 : index
    %9 = vector.load %arg6[%c0_13, %c0_14, %c0_15, %c4] : memref<1x4x8x23xf32, #tpu.memory_space<vmem>>, vector<1x4x8x5xf32>
    tpu.vector_store %arg6[%c0_13, %c0_14, %c0_15, %c4], %8 {strides = array<i32>} : memref<1x4x8x23xf32, #tpu.memory_space<vmem>>, vector<1x4x8x5xf32>,
    %c0_16 = arith.constant 0 : index
    %c0_17 = arith.constant 0 : index
    %c0_18 = arith.constant 0 : index
    %c0_19 = arith.constant 0 : index
    %10 = vector.load %arg2[%c0_16, %c0_17, %c0_18, %c0_19] : memref<1x4x1x6xf32, #tpu.memory_space<vmem>>, vector<1x4x1x6xf32>
    %11 = vector.shape_cast %10 : vector<1x4x1x6xf32> to vector<1x4x1x6xf32>
    %12 = vector.broadcast %11 : vector<1x4x1x6xf32> to vector<1x4x8x6xf32>
    %c0_20 = arith.constant 0 : index
    %c0_21 = arith.constant 0 : index
    %c0_22 = arith.constant 0 : index
    %c9 = arith.constant 9 : index
    %13 = vector.load %arg6[%c0_20, %c0_21, %c0_22, %c9] : memref<1x4x8x23xf32, #tpu.memory_space<vmem>>, vector<1x4x8x6xf32>
    tpu.vector_store %arg6[%c0_20, %c0_21, %c0_22, %c9], %12 {strides = array<i32>} : memref<1x4x8x23xf32, #tpu.memory_space<vmem>>, vector<1x4x8x6xf32>,
    %14 = tpu.iota {dimensions = array<i32: 2>} : vector<1x4x8x8xi32>
    %15 = tpu.iota {dimensions = array<i32: 3>} : vector<1x4x8x8xi32>
    %16 = arith.cmpi eq, %14, %15 : vector<1x4x8x8xi32>
    %17 = arith.extui %16 : vector<1x4x8x8xi1> to vector<1x4x8x8xi32>
    %18 = arith.sitofp %17 : vector<1x4x8x8xi32> to vector<1x4x8x8xf32>
    %c0_23 = arith.constant 0 : index
    %c0_24 = arith.constant 0 : index
    %c0_25 = arith.constant 0 : index
    %c15 = arith.constant 15 : index
    %19 = vector.load %arg6[%c0_23, %c0_24, %c0_25, %c15] : memref<1x4x8x23xf32, #tpu.memory_space<vmem>>, vector<1x4x8x8xf32>
    tpu.vector_store %arg6[%c0_23, %c0_24, %c0_25, %c15], %18 {strides = array<i32>} : memref<1x4x8x23xf32, #tpu.memory_space<vmem>>, vector<1x4x8x8xf32>,
    %c0_26 = arith.constant 0 : index
    %c0_27 = arith.constant 0 : index
    %c0_28 = arith.constant 0 : index
    %c0_29 = arith.constant 0 : index
    %20 = vector.load %arg3[%c0_26, %c0_27, %c0_28, %c0_29] : memref<1x6x16x4xf32, #tpu.memory_space<vmem>>, vector<1x6x16x4xf32>
    %c0_30 = arith.constant 0 : index
    %c0_31 = arith.constant 0 : index
    %c0_32 = arith.constant 0 : index
    %c0_33 = arith.constant 0 : index
    %21 = vector.load %arg7[%c0_30, %c0_31, %c0_32, %c0_33] : memref<1x6x16x31xf32, #tpu.memory_space<vmem>>, vector<1x6x16x4xf32>
    tpu.vector_store %arg7[%c0_30, %c0_31, %c0_32, %c0_33], %20 {strides = array<i32>} : memref<1x6x16x31xf32, #tpu.memory_space<vmem>>, vector<1x6x16x4xf32>,
    %c0_34 = arith.constant 0 : index
    %c0_35 = arith.constant 0 : index
    %c0_36 = arith.constant 0 : index
    %c0_37 = arith.constant 0 : index
    %22 = vector.load %arg4[%c0_34, %c0_35, %c0_36, %c0_37] : memref<1x6x1x11xf32, #tpu.memory_space<vmem>>, vector<1x6x1x11xf32>
    %23 = vector.shape_cast %22 : vector<1x6x1x11xf32> to vector<1x6x1x11xf32>
    %24 = vector.broadcast %23 : vector<1x6x1x11xf32> to vector<1x6x16x11xf32>
    %c0_38 = arith.constant 0 : index
    %c0_39 = arith.constant 0 : index
    %c0_40 = arith.constant 0 : index
    %c4_41 = arith.constant 4 : index
    %25 = vector.load %arg7[%c0_38, %c0_39, %c0_40, %c4_41] : memref<1x6x16x31xf32, #tpu.memory_space<vmem>>, vector<1x6x16x11xf32>
    tpu.vector_store %arg7[%c0_38, %c0_39, %c0_40, %c4_41], %24 {strides = array<i32>} : memref<1x6x16x31xf32, #tpu.memory_space<vmem>>, vector<1x6x16x11xf32>,
    %26 = tpu.iota {dimensions = array<i32: 2>} : vector<1x6x16x16xi32>
    %27 = tpu.iota {dimensions = array<i32: 3>} : vector<1x6x16x16xi32>
    %28 = arith.cmpi eq, %26, %27 : vector<1x6x16x16xi32>
    %29 = arith.extui %28 : vector<1x6x16x16xi1> to vector<1x6x16x16xi32>
    %30 = arith.sitofp %29 : vector<1x6x16x16xi32> to vector<1x6x16x16xf32>
    %c0_42 = arith.constant 0 : index
    %c0_43 = arith.constant 0 : index
    %c0_44 = arith.constant 0 : index
    %c15_45 = arith.constant 15 : index
    %31 = vector.load %arg7[%c0_42, %c0_43, %c0_44, %c15_45] : memref<1x6x16x31xf32, #tpu.memory_space<vmem>>, vector<1x6x16x16xf32>
    tpu.vector_store %arg7[%c0_42, %c0_43, %c0_44, %c15_45], %30 {strides = array<i32>} : memref<1x6x16x31xf32, #tpu.memory_space<vmem>>, vector<1x6x16x16xf32>,
    %c0_46 = arith.constant 0 : index
    %c0_47 = arith.constant 0 : index
    %c0_48 = arith.constant 0 : index
    %c0_49 = arith.constant 0 : index
    %32 = vector.load %arg5[%c0_46, %c0_47, %c0_48, %c0_49] : memref<1x8x5x9xf32, #tpu.memory_space<vmem>>, vector<1x8x5x9xf32>
    %c0_50 = arith.constant 0 : index
    %c0_51 = arith.constant 0 : index
    %c0_52 = arith.constant 0 : index
    %c0_53 = arith.constant 0 : index
    %33 = vector.load %arg8[%c0_50, %c0_51, %c0_52, %c0_53] : memref<1x8x5x17xf32, #tpu.memory_space<vmem>>, vector<1x8x5x9xf32>
    tpu.vector_store %arg8[%c0_50, %c0_51, %c0_52, %c0_53], %32 {strides = array<i32>} : memref<1x8x5x17xf32, #tpu.memory_space<vmem>>, vector<1x8x5x9xf32>,
    %34 = tpu.iota {dimensions = array<i32: 1>} : vector<1x8x5x8xi32>
    %35 = tpu.iota {dimensions = array<i32: 3>} : vector<1x8x5x8xi32>
    %36 = arith.cmpi eq, %34, %35 : vector<1x8x5x8xi32>
    %37 = arith.extui %36 : vector<1x8x5x8xi1> to vector<1x8x5x8xi32>
    %38 = arith.sitofp %37 : vector<1x8x5x8xi32> to vector<1x8x5x8xf32>
    %c0_54 = arith.constant 0 : index
    %c0_55 = arith.constant 0 : index
    %c0_56 = arith.constant 0 : index
    %c9_57 = arith.constant 9 : index
    %39 = vector.load %arg8[%c0_54, %c0_55, %c0_56, %c9_57] : memref<1x8x5x17xf32, #tpu.memory_space<vmem>>, vector<1x8x5x8xf32>
    tpu.vector_store %arg8[%c0_54, %c0_55, %c0_56, %c9_57], %38 {strides = array<i32>} : memref<1x8x5x17xf32, #tpu.memory_space<vmem>>, vector<1x8x5x8xf32>,
    return
  }
  func.func @transform_0(%arg0: i32) -> (i32, i32, i32, i32) {
    %c0_i32 = arith.constant 0 : i32
    %c0_i32_0 = arith.constant 0 : i32
    %c0_i32_1 = arith.constant 0 : i32
    %c0_i32_2 = arith.constant 0 : i32
    return %arg0, %c0_i32, %c0_i32_0, %c0_i32_1 : i32, i32, i32, i32
  }
  func.func @transform_1(%arg0: i32) -> (i32, i32, i32, i32) {
    %c0_i32 = arith.constant 0 : i32
    %c0_i32_0 = arith.constant 0 : i32
    %c0_i32_1 = arith.constant 0 : i32
    %c0_i32_2 = arith.constant 0 : i32
    return %arg0, %c0_i32, %c0_i32_0, %c0_i32_1 : i32, i32, i32, i32
  }
  func.func @transform_2(%arg0: i32) -> (i32, i32, i32, i32) {
    %c0_i32 = arith.constant 0 : i32
    %c0_i32_0 = arith.constant 0 : i32
    %c0_i32_1 = arith.constant 0 : i32
    %c0_i32_2 = arith.constant 0 : i32
    return %arg0, %c0_i32, %c0_i32_0, %c0_i32_1 : i32, i32, i32, i32
  }
  func.func @transform_3(%arg0: i32) -> (i32, i32, i32, i32) {
    %c0_i32 = arith.constant 0 : i32
    %c0_i32_0 = arith.constant 0 : i32
    %c0_i32_1 = arith.constant 0 : i32
    %c0_i32_2 = arith.constant 0 : i32
    return %arg0, %c0_i32, %c0_i32_0, %c0_i32_1 : i32, i32, i32, i32
  }
  func.func @transform_4(%arg0: i32) -> (i32, i32, i32, i32) {
    %c0_i32 = arith.constant 0 : i32
    %c0_i32_0 = arith.constant 0 : i32
    %c0_i32_1 = arith.constant 0 : i32
    %c0_i32_2 = arith.constant 0 : i32
    return %arg0, %c0_i32, %c0_i32_0, %c0_i32_1 : i32, i32, i32, i32
  }
  func.func @transform_5(%arg0: i32) -> (i32, i32, i32, i32) {
    %c0_i32 = arith.constant 0 : i32
    %c0_i32_0 = arith.constant 0 : i32
    %c0_i32_1 = arith.constant 0 : i32
    %c0_i32_2 = arith.constant 0 : i32
    return %arg0, %c0_i32, %c0_i32_0, %c0_i32_1 : i32, i32, i32, i32
  }
  func.func @transform_6(%arg0: i32) -> (i32, i32, i32, i32) {
    %c0_i32 = arith.constant 0 : i32
    %c0_i32_0 = arith.constant 0 : i32
    %c0_i32_1 = arith.constant 0 : i32
    %c0_i32_2 = arith.constant 0 : i32
    return %arg0, %c0_i32, %c0_i32_0, %c0_i32_1 : i32, i32, i32, i32
  }
  func.func @transform_7(%arg0: i32) -> (i32, i32, i32, i32) {
    %c0_i32 = arith.constant 0 : i32
    %c0_i32_0 = arith.constant 0 : i32
    %c0_i32_1 = arith.constant 0 : i32
    %c0_i32_2 = arith.constant 0 : i32
    return %arg0, %c0_i32, %c0_i32_0, %c0_i32_1 : i32, i32, i32, i32
  }
}

</mosaic_0001>

<llo_original>
// kernel: _pack_and_compute.1
$region0: #{_pack_and_compute.1}
  #allocation0 [shape = 'u32[]', space=smem, size = 0x4, offset = 0x4, fixed_abs, tag = 'smem constant byte address 0x4 - core index']
  #allocation1 [shape = 'u32[144,128]{1,0:T(1,128)}', space=vmem, size = 0x12000, scoped, tag = 'internal scratch']
  %s0 = inlined_call_operand.vmem [shape: f32[2,4,8,8], index: 0, kind: input, shape index: {}]
  %s1 = inlined_call_operand.vmem [shape: f32[2,4,1,6], index: 1, kind: input, shape index: {}]
  %s2 = inlined_call_operand.vmem [shape: f32[2,6,16,4], index: 2, kind: input, shape index: {}]
  %s3 = inlined_call_operand.vmem [shape: f32[2,6,1,11], index: 3, kind: input, shape index: {}]
  %s4 = inlined_call_operand.vmem [shape: f32[2,8,5,9], index: 4, kind: input, shape index: {}]
  %s5 = inlined_call_operand.hbm [shape: f32[2,4,8,23], index: 5, kind: output, shape index: {0}]
  %s6 = inlined_call_operand.hbm [shape: f32[2,6,16,31], index: 6, kind: output, shape index: {1}]
  %s7 = inlined_call_operand.vmem [shape: f32[2,8,5,17], index: 7, kind: output, shape index: {2}]
  %8 = xla_tuple %s5, %s6, %s7
  %s9 = sld [smem:[#allocation0]]
  $region69: #{_pack_and_compute.1} parent=0
    _
  %s11 = ssub.s32 1, %s9
  %s12 = scalar_select 0, %s11, %s9
  $region1: #{_pack_and_compute.1} parent=0
    #allocation2 [shape = 'u8[32768]{0}', space=vmem, size = 0x8000, scoped, tag = 'output window, operand 0']
    #allocation3 [shape = 's32[2]{0}', space=sflag, size = 0x8, scoped, tag = 'scoped memory for _pack_and_compute.1']
    #allocation4 [shape = 'u8[98304]{0}', space=vmem, size = 0x18000, scoped, tag = 'output window, operand 1']
    #allocation5 [shape = 's32[2]{0}', space=sflag, size = 0x8, scoped, tag = 'scoped memory for _pack_and_compute.1']
    %13 = vsyncpa [#allocation3], 0
    %s14 = scalar_lea.sflag [#allocation3], 1
    %15 = vsyncpa %s14, 0
    %16 = vsyncpa [#allocation5], 0
    %s17 = scalar_lea.sflag [#allocation5], 1
    %18 = vsyncpa %s17, 0
    loop: start=0, step=1, limit=4
    $region2: #{_pack_and_compute.1} parent=1 // loop_pre_header
      _
    $region3: #{_pack_and_compute.1} parent=1 // loop_header
      %s20 = sphi 0, %s24
      %p21 = scmp.ge.s32.totalorder %s20, 4
      %s30 = sphi 0, %s32
      %s33 = sphi 0, %s30
      %s34 = sphi 0, %s33
      %s50 = sphi 0, %s34
      %s56 = sphi 0, %s58
      %s59 = sphi 0, %s56
      %s60 = sphi 0, %s59
      %s76 = sphi 0, %s60
      %s82 = sphi 0, %s84
      %s85 = sphi 0, %s82
      %s86 = sphi 0, %s85
      %s102 = sphi 0, %s86
      %s108 = sphi 0, %s110
      %s111 = sphi 0, %s108
      %s112 = sphi 0, %s111
      %s128 = sphi 0, %s112
      %s134 = sphi 0, %s136
      %s137 = sphi 0, %s134
      %s138 = sphi 0, %s137
      %s154 = sphi 0, %s138
      %s160 = sphi 0, %s162
      %s163 = sphi 0, %s160
      %s164 = sphi 0, %s163
      %s180 = sphi 0, %s164
      %s186 = sphi 0, %s188
      %s189 = sphi 0, %s186
      %s190 = sphi 0, %s189
      %s206 = sphi 0, %s190
      %s212 = sphi 0, %s214
      %s215 = sphi 0, %s212
      %s216 = sphi 0, %s215
      %s232 = sphi 0, %s216
    $region4: #{_pack_and_compute.1} parent=1 // loop_header_branch
      %23 = sbr.rel (%p21) target = $region8
    $region5: #{_pack_and_compute.1} parent=1 // loop_body
      %s25 = ssub.s32 %s20, 1
      %s26 = ssub.s32 %s20, 2
      %s27 = sadd.s32 %s20, 1
      %s28 = ssub.s32 %s20, %s27
      %p29 = scmp.eq.s32.totalorder %s28, 0
      %s31 = sadd.s32 %s30, 1
      %s32 = scalar_select %p29, %s30, %s31
      %p35 = pneg %p29
      %p36 = scmp.eq.s32.totalorder %s20, 1
      %p37 = por %p35, %p36
      %p38 = scmp.ne.s32.totalorder %s30, %s33
      %p39 = scmp.eq.s32.totalorder %s20, 0
      %p40 = por %p38, %p39
      %p41 = scmp.ne.s32.totalorder %s30, %s33
      %p42 = scmp.eq.s32.totalorder %s25, 1
      %p43 = por %p41, %p42
      %p44 = scmp.ne.s32.totalorder %s33, %s34
      %p45 = scmp.eq.s32.totalorder %s25, 0
      %p46 = por %p44, %p45
      %p47 = scmp.ne.s32.totalorder %s33, %s34
      %p48 = scmp.eq.s32.totalorder %s26, 1
      %p49 = por %p47, %p48
      %p51 = scmp.ne.s32.totalorder %s34, %s50
      %p52 = scmp.eq.s32.totalorder %s26, 0
      %p53 = por %p51, %p52
      %s54 = ssub.s32 %s20, %s27
      %p55 = scmp.eq.s32.totalorder %s54, 0
      %s57 = sadd.s32 %s56, 1
      %s58 = scalar_select %p55, %s56, %s57
      %p61 = pneg %p55
      %p62 = scmp.eq.s32.totalorder %s20, 1
      %p63 = por %p61, %p62
      %p64 = scmp.ne.s32.totalorder %s56, %s59
      %p65 = scmp.eq.s32.totalorder %s20, 0
      %p66 = por %p64, %p65
      %p67 = scmp.ne.s32.totalorder %s56, %s59
      %p68 = scmp.eq.s32.totalorder %s25, 1
      %p69 = por %p67, %p68
      %p70 = scmp.ne.s32.totalorder %s59, %s60
      %p71 = scmp.eq.s32.totalorder %s25, 0
      %p72 = por %p70, %p71
      %p73 = scmp.ne.s32.totalorder %s59, %s60
      %p74 = scmp.eq.s32.totalorder %s26, 1
      %p75 = por %p73, %p74
      %p77 = scmp.ne.s32.totalorder %s60, %s76
      %p78 = scmp.eq.s32.totalorder %s26, 0
      %p79 = por %p77, %p78
      %s80 = ssub.s32 %s20, %s27
      %p81 = scmp.eq.s32.totalorder %s80, 0
      %s83 = sadd.s32 %s82, 1
      %s84 = scalar_select %p81, %s82, %s83
      %p87 = pneg %p81
      %p88 = scmp.eq.s32.totalorder %s20, 1
      %p89 = por %p87, %p88
      %p90 = scmp.ne.s32.totalorder %s82, %s85
      %p91 = scmp.eq.s32.totalorder %s20, 0
      %p92 = por %p90, %p91
      %p93 = scmp.ne.s32.totalorder %s82, %s85
      %p94 = scmp.eq.s32.totalorder %s25, 1
      %p95 = por %p93, %p94
      %p96 = scmp.ne.s32.totalorder %s85, %s86
      %p97 = scmp.eq.s32.totalorder %s25, 0
      %p98 = por %p96, %p97
      %p99 = scmp.ne.s32.totalorder %s85, %s86
      %p100 = scmp.eq.s32.totalorder %s26, 1
      %p101 = por %p99, %p100
      %p103 = scmp.ne.s32.totalorder %s86, %s102
      %p104 = scmp.eq.s32.totalorder %s26, 0
      %p105 = por %p103, %p104
      %s106 = ssub.s32 %s20, %s27
      %p107 = scmp.eq.s32.totalorder %s106, 0
      %s109 = sadd.s32 %s108, 1
      %s110 = scalar_select %p107, %s108, %s109
      %p113 = pneg %p107
      %p114 = scmp.eq.s32.totalorder %s20, 1
      %p115 = por %p113, %p114
      %p116 = scmp.ne.s32.totalorder %s108, %s111
      %p117 = scmp.eq.s32.totalorder %s20, 0
      %p118 = por %p116, %p117
      %p119 = scmp.ne.s32.totalorder %s108, %s111
      %p120 = scmp.eq.s32.totalorder %s25, 1
      %p121 = por %p119, %p120
      %p122 = scmp.ne.s32.totalorder %s111, %s112
      %p123 = scmp.eq.s32.totalorder %s25, 0
      %p124 = por %p122, %p123
      %p125 = scmp.ne.s32.totalorder %s111, %s112
      %p126 = scmp.eq.s32.totalorder %s26, 1
      %p127 = por %p125, %p126
      %p129 = scmp.ne.s32.totalorder %s112, %s128
      %p130 = scmp.eq.s32.totalorder %s26, 0
      %p131 = por %p129, %p130
      %s132 = ssub.s32 %s20, %s27
      %p133 = scmp.eq.s32.totalorder %s132, 0
      %s135 = sadd.s32 %s134, 1
      %s136 = scalar_select %p133, %s134, %s135
      %p139 = pneg %p133
      %p140 = scmp.eq.s32.totalorder %s20, 1
      %p141 = por %p139, %p140
      %p142 = scmp.ne.s32.totalorder %s134, %s137
      %p143 = scmp.eq.s32.totalorder %s20, 0
      %p144 = por %p142, %p143
      %p145 = scmp.ne.s32.totalorder %s134, %s137
      %p146 = scmp.eq.s32.totalorder %s25, 1
      %p147 = por %p145, %p146
      %p148 = scmp.ne.s32.totalorder %s137, %s138
      %p149 = scmp.eq.s32.totalorder %s25, 0
      %p150 = por %p148, %p149
      %p151 = scmp.ne.s32.totalorder %s137, %s138
      %p152 = scmp.eq.s32.totalorder %s26, 1
      %p153 = por %p151, %p152
      %p155 = scmp.ne.s32.totalorder %s138, %s154
      %p156 = scmp.eq.s32.totalorder %s26, 0
      %p157 = por %p155, %p156
      %s158 = ssub.s32 %s20, %s27
      %p159 = scmp.eq.s32.totalorder %s158, 0
      %s161 = sadd.s32 %s160, 1
      %s162 = scalar_select %p159, %s160, %s161
      %p165 = pneg %p159
      %p166 = scmp.eq.s32.totalorder %s20, 1
      %p167 = por %p165, %p166
      %p168 = scmp.ne.s32.totalorder %s160, %s163
      %p169 = scmp.eq.s32.totalorder %s20, 0
      %p170 = por %p168, %p169
      %p171 = scmp.ne.s32.totalorder %s160, %s163
      %p172 = scmp.eq.s32.totalorder %s25, 1
      %p173 = por %p171, %p172
      %p174 = scmp.ne.s32.totalorder %s163, %s164
      %p175 = scmp.eq.s32.totalorder %s25, 0
      %p176 = por %p174, %p175
      %p177 = scmp.ne.s32.totalorder %s163, %s164
      %p178 = scmp.eq.s32.totalorder %s26, 1
      %p179 = por %p177, %p178
      %p181 = scmp.ne.s32.totalorder %s164, %s180
      %p182 = scmp.eq.s32.totalorder %s26, 0
      %p183 = por %p181, %p182
      %s184 = ssub.s32 %s20, %s27
      %p185 = scmp.eq.s32.totalorder %s184, 0
      %s187 = sadd.s32 %s186, 1
      %s188 = scalar_select %p185, %s186, %s187
      %p191 = pneg %p185
      %p192 = scmp.eq.s32.totalorder %s20, 1
      %p193 = por %p191, %p192
      %p194 = scmp.ne.s32.totalorder %s186, %s189
      %p195 = scmp.eq.s32.totalorder %s20, 0
      %p196 = por %p194, %p195
      %p197 = scmp.ne.s32.totalorder %s186, %s189
      %p198 = scmp.eq.s32.totalorder %s25, 1
      %p199 = por %p197, %p198
      %p200 = scmp.ne.s32.totalorder %s189, %s190
      %p201 = scmp.eq.s32.totalorder %s25, 0
      %p202 = por %p200, %p201
      %p203 = scmp.ne.s32.totalorder %s189, %s190
      %p204 = scmp.eq.s32.totalorder %s26, 1
      %p205 = por %p203, %p204
      %p207 = scmp.ne.s32.totalorder %s190, %s206
      %p208 = scmp.eq.s32.totalorder %s26, 0
      %p209 = por %p207, %p208
      %s210 = ssub.s32 %s20, %s27
      %p211 = scmp.eq.s32.totalorder %s210, 0
      %s213 = sadd.s32 %s212, 1
      %s214 = scalar_select %p211, %s212, %s213
      %p217 = pneg %p211
      %p218 = scmp.eq.s32.totalorder %s20, 1
      %p219 = por %p217, %p218
      %p220 = scmp.ne.s32.totalorder %s212, %s215
      %p221 = scmp.eq.s32.totalorder %s20, 0
      %p222 = por %p220, %p221
      %p223 = scmp.ne.s32.totalorder %s212, %s215
      %p224 = scmp.eq.s32.totalorder %s25, 1
      %p225 = por %p223, %p224
      %p226 = scmp.ne.s32.totalorder %s215, %s216
      %p227 = scmp.eq.s32.totalorder %s25, 0
      %p228 = por %p226, %p227
      %p229 = scmp.ne.s32.totalorder %s215, %s216
      %p230 = scmp.eq.s32.totalorder %s26, 1
      %p231 = por %p229, %p230
      %p233 = scmp.ne.s32.totalorder %s216, %s232
      %p234 = scmp.eq.s32.totalorder %s26, 0
      %p235 = por %p233, %p234
      %p236 = scmp.le.s32.totalorder 1, %s20
      %p237 = scmp.lt.s32.totalorder %s20, 3
      %p238 = pnand %p236, %p237
      %p239 = pneg %p238
      // Predicated region
      $region9: #{_pack_and_compute.1} parent=5 // pred_check
        _
      $region10: #{_pack_and_compute.1} parent=5 // pred_check_branch
        %241 = sbr.rel (%p238) target = $region12
      $region11: #{_pack_and_compute.1} parent=5 // pred_region
        %s242 = ssub.s32 %s20, 1
      $region12: #{_pack_and_compute.1} parent=5 // pred_fallthru
        _
      %p243 = scmp.lt.s32.totalorder %s20, 2
      // Predicated region
      $region13: #{_pack_and_compute.1} parent=5 // pred_check
        %p244 = pneg %p243
      $region14: #{_pack_and_compute.1} parent=5 // pred_check_branch
        %246 = sbr.rel (%p244) target = $region16
      $region15: #{_pack_and_compute.1} parent=5 // pred_region
        // Predicated region
        $region17: #{_pack_and_compute.1} parent=15 // pred_check
          %p247 = pneg %p40
        $region18: #{_pack_and_compute.1} parent=15 // pred_check_branch
          %249 = sbr.rel (%p247) target = $region20
        $region19: #{_pack_and_compute.1} parent=15 // pred_region
          %p250 = scmp.lt.s32.totalorder %s20, 1
          %s251 = scalar_select %p250, %s20, 1
          %s252 = smul.addr %s251, 4
          %s253 = smul.addr %s252, 8
          %s254 = scalar_lea.vmem %s0, %s253
        $region20: #{_pack_and_compute.1} parent=15 // pred_fallthru
          _
        // Predicated region
        $region21: #{_pack_and_compute.1} parent=15 // pred_check
          %p255 = pneg %p66
        $region22: #{_pack_and_compute.1} parent=15 // pred_check_branch
          %257 = sbr.rel (%p255) target = $region24
        $region23: #{_pack_and_compute.1} parent=15 // pred_region
          %p258 = scmp.lt.s32.totalorder %s20, 1
          %s259 = scalar_select %p258, %s20, 1
          %s260 = smul.addr %s259, 4
          %s261 = scalar_lea.vmem %s1, %s260
        $region24: #{_pack_and_compute.1} parent=15 // pred_fallthru
          _
        // Predicated region
        $region25: #{_pack_and_compute.1} parent=15 // pred_check
          %p262 = pneg %p92
        $region26: #{_pack_and_compute.1} parent=15 // pred_check_branch
          %264 = sbr.rel (%p262) target = $region28
        $region27: #{_pack_and_compute.1} parent=15 // pred_region
          %p265 = scmp.lt.s32.totalorder %s20, 1
          %s266 = scalar_select %p265, %s20, 1
          %s267 = smul.addr %s266, 12
          %s268 = smul.addr %s267, 8
          %s269 = scalar_lea.vmem %s2, %s268
        $region28: #{_pack_and_compute.1} parent=15 // pred_fallthru
          _
        // Predicated region
        $region29: #{_pack_and_compute.1} parent=15 // pred_check
          %p270 = pneg %p118
        $region30: #{_pack_and_compute.1} parent=15 // pred_check_branch
          %272 = sbr.rel (%p270) target = $region32
        $region31: #{_pack_and_compute.1} parent=15 // pred_region
          %p273 = scmp.lt.s32.totalorder %s20, 1
          %s274 = scalar_select %p273, %s20, 1
          %s275 = smul.addr %s274, 6
          %s276 = scalar_lea.vmem %s3, %s275
        $region32: #{_pack_and_compute.1} parent=15 // pred_fallthru
          _
        // Predicated region
        $region33: #{_pack_and_compute.1} parent=15 // pred_check
          %p277 = pneg %p144
        $region34: #{_pack_and_compute.1} parent=15 // pred_check_branch
          %279 = sbr.rel (%p277) target = $region36
        $region35: #{_pack_and_compute.1} parent=15 // pred_region
          %p280 = scmp.lt.s32.totalorder %s20, 1
          %s281 = scalar_select %p280, %s20, 1
          %s282 = smul.addr %s281, 8
          %s283 = smul.addr %s282, 8
          %s284 = scalar_lea.vmem %s4, %s283
        $region36: #{_pack_and_compute.1} parent=15 // pred_fallthru
          _
      $region16: #{_pack_and_compute.1} parent=5 // pred_fallthru
        _
      %p285 = scmp.le.s32.totalorder 1, %s20
      %p286 = scmp.lt.s32.totalorder %s20, 3
      %p287 = pnand %p285, %p286
      %p288 = pneg %p287
      // Predicated region
      $region37: #{_pack_and_compute.1} parent=5 // pred_check
        _
      $region38: #{_pack_and_compute.1} parent=5 // pred_check_branch
        %290 = sbr.rel (%p287) target = $region40
      $region39: #{_pack_and_compute.1} parent=5 // pred_region
        %s291 = ssub.s32 %s20, 1
        %p292 = scmp.lt.s32.totalorder %s25, 1
        %s293 = scalar_select %p292, %s25, 1
        %s294 = smul.addr %s293, 4
        %s295 = smul.addr %s294, 8
        %s296 = scalar_lea.vmem %s0, %s295
        %p297 = pneg %p46
        %p298 = pneg %p43
        %p299 = scmp.lt.s32.totalorder %s25, 1
        %s300 = scalar_select %p299, %s25, 1
        %s301 = smul.addr %s300, 4
        %s302 = scalar_lea.vmem %s1, %s301
        %p303 = pneg %p72
        %p304 = pneg %p69
        %p305 = scmp.lt.s32.totalorder %s25, 1
        %s306 = scalar_select %p305, %s25, 1
        %s307 = smul.addr %s306, 12
        %s308 = smul.addr %s307, 8
        %s309 = scalar_lea.vmem %s2, %s308
        %p310 = pneg %p98
        %p311 = pneg %p95
        %p312 = scmp.lt.s32.totalorder %s25, 1
        %s313 = scalar_select %p312, %s25, 1
        %s314 = smul.addr %s313, 6
        %s315 = scalar_lea.vmem %s3, %s314
        %p316 = pneg %p124
        %p317 = pneg %p121
        %p318 = scmp.lt.s32.totalorder %s25, 1
        %s319 = scalar_select %p318, %s25, 1
        %s320 = smul.addr %s319, 8
        %s321 = smul.addr %s320, 8
        %s322 = scalar_lea.vmem %s4, %s321
        %p323 = pneg %p150
        %p324 = pneg %p147
        %p325 = pneg %p176
        %p326 = pneg %p173
        %s327 = sand.u32 %s163, 1
        %s328 = scalar_lea.sflag [#allocation3], %s327
        %s329 = sand.u32 %s163, 1
        %s330 = smul.addr %s329, 32
        %s331 = scalar_lea.vmem [#allocation2], %s330
        %p332 = pneg %p202
        %p333 = pneg %p199
        %s334 = sand.u32 %s189, 1
        %s335 = scalar_lea.sflag [#allocation5], %s334
        %s336 = sand.u32 %s189, 1
        %s337 = smul.addr %s336, 96
        %s338 = scalar_lea.vmem [#allocation4], %s337
        %p339 = pneg %p228
        %p340 = pneg %p225
        %p341 = scmp.lt.s32.totalorder %s25, 1
        %s342 = scalar_select %p341, %s25, 1
        %s343 = smul.addr %s342, 8
        %s344 = smul.addr %s343, 8
        %s345 = scalar_lea.vmem %s7, %s344
        %p346 = scmp.lt.s32.totalorder %s25, 1
        %s347 = scalar_select %p346, %s25, 1
        %s348 = smul.addr %s347, 4
        %s349 = smul.addr %s348, 8
        %s350 = scalar_lea.vmem %s0, %s349
        %p351 = scmp.lt.s32.totalorder %s25, 1
        %s352 = scalar_select %p351, %s25, 1
        %s353 = smul.addr %s352, 4
        %s354 = scalar_lea.vmem %s1, %s353
        %p355 = scmp.lt.s32.totalorder %s25, 1
        %s356 = scalar_select %p355, %s25, 1
        %s357 = smul.addr %s356, 12
        %s358 = smul.addr %s357, 8
        %s359 = scalar_lea.vmem %s2, %s358
        %p360 = scmp.lt.s32.totalorder %s25, 1
        %s361 = scalar_select %p360, %s25, 1
        %s362 = smul.addr %s361, 6
        %s363 = scalar_lea.vmem %s3, %s362
        %p364 = scmp.lt.s32.totalorder %s25, 1
        %s365 = scalar_select %p364, %s25, 1
        %s366 = smul.addr %s365, 8
        %s367 = smul.addr %s366, 8
        %s368 = scalar_lea.vmem %s4, %s367
        %p369 = scmp.lt.s32.totalorder %s25, 1
        %s370 = scalar_select %p369, %s25, 1
        %s371 = smul.addr %s370, 8
        %s372 = smul.addr %s371, 8
        %s373 = scalar_lea.vmem %s7, %s372
        %v374 = vld [vmem:[%s350] sm:$0xff]
        %v375 = vld [vmem:[%s350 + $0x8] sm:$0xff]
        %v376 = vld [vmem:[%s350 + $0x10] sm:$0xff]
        %v377 = vld [vmem:[%s350 + $0x18] sm:$0xff]
        %vm378 = vcmask 15360
        %379 = vst.msk [vmem:[%s331] sm:$0xff] %vm378, %v374
        %380 = vst.msk [vmem:[%s331 + $0x8] sm:$0xff] %vm378, %v375
        %381 = vst.msk [vmem:[%s331 + $0x10] sm:$0xff] %vm378, %v376
        %382 = vst.msk [vmem:[%s331 + $0x18] sm:$0xff] %vm378, %v377
        %v383 = vand.u32 2147483647, %v374
        %vm384 = vcmp.le.f32.partialorder %v383, 0.7853982
        %vm385 = vcmp.lt.s32.totalorder %v374, 0
        %v386 = vand.u32 %v374, 2139095040
        %v387 = vshrl.u32 %v386, 23
        %v388 = vsub.s32 %v387, 127
        %v389 = vand.u32 2147483647, %v374
        %v390 = vand.u32 %v389, 8388607
        %v391 = vor.u32 %v390, 8388608
        %v392 = vsub.s32 0, %v391
        %v393 = vadd.s32 %v388, 1
        %vm394 = vcmp.gt.s32.totalorder %v393, 0
        %v395 = vsel %vm394, %v393, 0
        %v396 = vshrl.u32 %v395, 5
        %v397 = vand.u32 %v395, 31
        %v398 = vsub.s32 32, %v397
        %v399 = vshrl.u32 683565275, %v398
        %v400 = vshll.u32 683565275, %v397
        %v401 = vshrl.u32 2475754826, %v398
        %v402 = vor.u32 %v400, %v401
        %v403 = vshll.u32 2475754826, %v397
        %v404 = vshrl.u32 2131351028, %v398
        %v405 = vor.u32 %v403, %v404
        %v406 = vshll.u32 2131351028, %v397
        %v407 = vshrl.u32 2102212464, %v398
        %v408 = vor.u32 %v406, %v407
        %v409 = vshll.u32 2102212464, %v397
        %v410 = vshrl.u32 920167782, %v398
        %v411 = vor.u32 %v409, %v410
        %v412 = vshll.u32 920167782, %v397
        %v413 = vshrl.u32 1326507024, %v398
        %v414 = vor.u32 %v412, %v413
        %vm415 = vcmp.lt.s32.totalorder %v396, 1
        %vm416 = vcmp.lt.s32.totalorder %v396, 2
        %vm417 = vcmp.lt.s32.totalorder %v396, 3
        %vm418 = vcmp.lt.s32.totalorder %v396, 4
        %v419 = vsel %vm415, %v399, %v402
        %v420 = vsel %vm418, %v408, 2102212464
        %v421 = vsel %vm417, %v405, %v420
        %v422 = vsel %vm416, %v419, %v421
        %v423 = vsel %vm415, %v402, %v405
        %v424 = vsel %vm418, %v411, 920167782
        %v425 = vsel %vm417, %v408, %v424
        %v426 = vsel %vm416, %v423, %v425
        %v427 = vsel %vm415, %v405, %v408
        %v428 = vsel %vm418, %v414, 1326507024
        %v429 = vsel %vm417, %v411, %v428
        %v430 = vsel %vm416, %v427, %v429
        %v431 = vshll.u32 %v391, 8
        %v432 = vmul.u32.u64.compose %v431, %v430
        %v433 = vextract.low.u32 %v432
        %v434 = vextract.high.u32 %v432
        %v435 = vmul.u32.u64.compose %v431, %v426
        %v436 = vextract.low.u32 %v435
        %v437 = vextract.high.u32 %v435
        %v438 = vmul.u32 %v431, %v422
        %v439 = vadd.s32 %v434, %v436
        %vm440 = vc.u32 %v434, %v436
        %v441 = vadd.s32 %v437, 1
        %v442 = vsel %vm440, %v441, %v437
        %v443 = vadd.s32 %v438, %v442
        %v444 = vadd.s32 %v443, 536870912
        %v445 = vshrl.u32 %v444, 30
        %v446 = vshll.u32 %v445, 30
        %v447 = vsub.s32 %v443, %v446
        %vm448 = vcmp.lt.s32.totalorder %v447, 0
        %v449 = vsub.s32 0, %v447
        %v450 = vsel %vm448, %v449, %v447
        %v451 = vclz %v450
        %v452 = vsub.s32 %v451, 2
        %vm453 = vcmp.gt.s32.totalorder 0, %v452
        %v454 = vsel %vm453, 0, %v452
        %v455 = vsub.s32 32, %v454
        %v456 = vshll.u32 %v447, %v454
        %v457 = vshrl.u32 %v439, %v455
        %v458 = vor.u32 %v456, %v457
        %v459 = vsub.s32 4294967266, %v454
        %v460 = vadd.s32 %v459, 127
        %v461 = vshll.u32 %v460, 23
        %v462 = vor.u32 4788187, %v461
        %v463 = vand.u32 2147483647, %v462
        %v465 = vcvt.s32.f32 %v458
        %v466 = vmul.f32 %v465, %v463
        %v467 = vxor.u32 %v466, 2147483648
        %v468 = vsel %vm385, %v467, %v466
        %v469 = vsub.s32 4, %v445
        %v470 = vsel %vm385, %v469, %v445
        %v471 = vsel %vm384, %v374, %v468
        %v472 = vsel %vm384, 0, %v470
        %v473 = vcosq.f32.pop %v471
        %v474 = vsinq.f32.pop %v471
        %vm475 = vweird.f32 %v374
        %v476 = vand.u32 %v472, 3
        %vm477 = vcmp.lt.s32.totalorder %v476, 2
        %vm478 = vcmp.eq.s32.totalorder %v476, 0
        %v479 = vxor.u32 %v474, 2147483648
        %v480 = vsel %vm478, %v473, %v479
        %vm481 = vcmp.eq.s32.totalorder %v476, 2
        %v482 = vxor.u32 %v473, 2147483648
        %v483 = vsel %vm481, %v482, %v474
        %v484 = vsel %vm477, %v480, %v483
        %v485 = vsel %vm475, nan, %v484
        %v486 = vand.u32 2147483647, %v375
        %vm487 = vcmp.le.f32.partialorder %v486, 0.7853982
        %vm488 = vcmp.lt.s32.totalorder %v375, 0
        %v489 = vand.u32 %v375, 2139095040
        %v490 = vshrl.u32 %v489, 23
        %v491 = vsub.s32 %v490, 127
        %v492 = vand.u32 2147483647, %v375
        %v493 = vand.u32 %v492, 8388607
        %v494 = vor.u32 %v493, 8388608
        %v495 = vsub.s32 0, %v494
        %v496 = vadd.s32 %v491, 1
        %vm497 = vcmp.gt.s32.totalorder %v496, 0
        %v498 = vsel %vm497, %v496, 0
        %v499 = vshrl.u32 %v498, 5
        %v500 = vand.u32 %v498, 31
        %v501 = vsub.s32 32, %v500
        %v502 = vshrl.u32 683565275, %v501
        %v503 = vshll.u32 683565275, %v500
        %v504 = vshrl.u32 2475754826, %v501
        %v505 = vor.u32 %v503, %v504
        %v506 = vshll.u32 2475754826, %v500
        %v507 = vshrl.u32 2131351028, %v501
        %v508 = vor.u32 %v506, %v507
        %v509 = vshll.u32 2131351028, %v500
        %v510 = vshrl.u32 2102212464, %v501
        %v511 = vor.u32 %v509, %v510
        %v512 = vshll.u32 2102212464, %v500
        %v513 = vshrl.u32 920167782, %v501
        %v514 = vor.u32 %v512, %v513
        %v515 = vshll.u32 920167782, %v500
        %v516 = vshrl.u32 1326507024, %v501
        %v517 = vor.u32 %v515, %v516
        %vm518 = vcmp.lt.s32.totalorder %v499, 1
        %vm519 = vcmp.lt.s32.totalorder %v499, 2
        %vm520 = vcmp.lt.s32.totalorder %v499, 3
        %vm521 = vcmp.lt.s32.totalorder %v499, 4
        %v522 = vsel %vm518, %v502, %v505
        %v523 = vsel %vm521, %v511, 2102212464
        %v524 = vsel %vm520, %v508, %v523
        %v525 = vsel %vm519, %v522, %v524
        %v526 = vsel %vm518, %v505, %v508
        %v527 = vsel %vm521, %v514, 920167782
        %v528 = vsel %vm520, %v511, %v527
        %v529 = vsel %vm519, %v526, %v528
        %v530 = vsel %vm518, %v508, %v511
        %v531 = vsel %vm521, %v517, 1326507024
        %v532 = vsel %vm520, %v514, %v531
        %v533 = vsel %vm519, %v530, %v532
        %v534 = vshll.u32 %v494, 8
        %v535 = vmul.u32.u64.compose %v534, %v533
        %v536 = vextract.low.u32 %v535
        %v537 = vextract.high.u32 %v535
        %v538 = vmul.u32.u64.compose %v534, %v529
        %v539 = vextract.low.u32 %v538
        %v540 = vextract.high.u32 %v538
        %v541 = vmul.u32 %v534, %v525
        %v542 = vadd.s32 %v537, %v539
        %vm543 = vc.u32 %v537, %v539
        %v544 = vadd.s32 %v540, 1
        %v545 = vsel %vm543, %v544, %v540
        %v546 = vadd.s32 %v541, %v545
        %v547 = vadd.s32 %v546, 536870912
        %v548 = vshrl.u32 %v547, 30
        %v549 = vshll.u32 %v548, 30
        %v550 = vsub.s32 %v546, %v549
        %vm551 = vcmp.lt.s32.totalorder %v550, 0
        %v552 = vsub.s32 0, %v550
        %v553 = vsel %vm551, %v552, %v550
        %v554 = vclz %v553
        %v555 = vsub.s32 %v554, 2
        %vm556 = vcmp.gt.s32.totalorder 0, %v555
        %v557 = vsel %vm556, 0, %v555
        %v558 = vsub.s32 32, %v557
        %v559 = vshll.u32 %v550, %v557
        %v560 = vshrl.u32 %v542, %v558
        %v561 = vor.u32 %v559, %v560
        %v562 = vsub.s32 4294967266, %v557
        %v563 = vadd.s32 %v562, 127
        %v564 = vshll.u32 %v563, 23
        %v565 = vor.u32 4788187, %v564
        %v566 = vand.u32 2147483647, %v565
        %v568 = vcvt.s32.f32 %v561
        %v569 = vmul.f32 %v568, %v566
        %v570 = vxor.u32 %v569, 2147483648
        %v571 = vsel %vm488, %v570, %v569
        %v572 = vsub.s32 4, %v548
        %v573 = vsel %vm488, %v572, %v548
        %v574 = vsel %vm487, %v375, %v571
        %v575 = vsel %vm487, 0, %v573
        %v576 = vcosq.f32.pop %v574
        %v577 = vsinq.f32.pop %v574
        %vm578 = vweird.f32 %v375
        %v579 = vand.u32 %v575, 3
        %vm580 = vcmp.lt.s32.totalorder %v579, 2
        %vm581 = vcmp.eq.s32.totalorder %v579, 0
        %v582 = vxor.u32 %v577, 2147483648
        %v583 = vsel %vm581, %v576, %v582
        %vm584 = vcmp.eq.s32.totalorder %v579, 2
        %v585 = vxor.u32 %v576, 2147483648
        %v586 = vsel %vm584, %v585, %v577
        %v587 = vsel %vm580, %v583, %v586
        %v588 = vsel %vm578, nan, %v587
        %v589 = vand.u32 2147483647, %v376
        %vm590 = vcmp.le.f32.partialorder %v589, 0.7853982
        %vm591 = vcmp.lt.s32.totalorder %v376, 0
        %v592 = vand.u32 %v376, 2139095040
        %v593 = vshrl.u32 %v592, 23
        %v594 = vsub.s32 %v593, 127
        %v595 = vand.u32 2147483647, %v376
        %v596 = vand.u32 %v595, 8388607
        %v597 = vor.u32 %v596, 8388608
        %v598 = vsub.s32 0, %v597
        %v599 = vadd.s32 %v594, 1
        %vm600 = vcmp.gt.s32.totalorder %v599, 0
        %v601 = vsel %vm600, %v599, 0
        %v602 = vshrl.u32 %v601, 5
        %v603 = vand.u32 %v601, 31
        %v604 = vsub.s32 32, %v603
        %v605 = vshrl.u32 683565275, %v604
        %v606 = vshll.u32 683565275, %v603
        %v607 = vshrl.u32 2475754826, %v604
        %v608 = vor.u32 %v606, %v607
        %v609 = vshll.u32 2475754826, %v603
        %v610 = vshrl.u32 2131351028, %v604
        %v611 = vor.u32 %v609, %v610
        %v612 = vshll.u32 2131351028, %v603
        %v613 = vshrl.u32 2102212464, %v604
        %v614 = vor.u32 %v612, %v613
        %v615 = vshll.u32 2102212464, %v603
        %v616 = vshrl.u32 920167782, %v604
        %v617 = vor.u32 %v615, %v616
        %v618 = vshll.u32 920167782, %v603
        %v619 = vshrl.u32 1326507024, %v604
        %v620 = vor.u32 %v618, %v619
        %vm621 = vcmp.lt.s32.totalorder %v602, 1
        %vm622 = vcmp.lt.s32.totalorder %v602, 2
        %vm623 = vcmp.lt.s32.totalorder %v602, 3
        %vm624 = vcmp.lt.s32.totalorder %v602, 4
        %v625 = vsel %vm621, %v605, %v608
        %v626 = vsel %vm624, %v614, 2102212464
        %v627 = vsel %vm623, %v611, %v626
        %v628 = vsel %vm622, %v625, %v627
        %v629 = vsel %vm621, %v608, %v611
        %v630 = vsel %vm624, %v617, 920167782
        %v631 = vsel %vm623, %v614, %v630
        %v632 = vsel %vm622, %v629, %v631
        %v633 = vsel %vm621, %v611, %v614
        %v634 = vsel %vm624, %v620, 1326507024
        %v635 = vsel %vm623, %v617, %v634
        %v636 = vsel %vm622, %v633, %v635
        %v637 = vshll.u32 %v597, 8
        %v638 = vmul.u32.u64.compose %v637, %v636
        %v639 = vextract.low.u32 %v638
        %v640 = vextract.high.u32 %v638
        %v641 = vmul.u32.u64.compose %v637, %v632
        %v642 = vextract.low.u32 %v641
        %v643 = vextract.high.u32 %v641
        %v644 = vmul.u32 %v637, %v628
        %v645 = vadd.s32 %v640, %v642
        %vm646 = vc.u32 %v640, %v642
        %v647 = vadd.s32 %v643, 1
        %v648 = vsel %vm646, %v647, %v643
        %v649 = vadd.s32 %v644, %v648
        %v650 = vadd.s32 %v649, 536870912
        %v651 = vshrl.u32 %v650, 30
        %v652 = vshll.u32 %v651, 30
        %v653 = vsub.s32 %v649, %v652
        %vm654 = vcmp.lt.s32.totalorder %v653, 0
        %v655 = vsub.s32 0, %v653
        %v656 = vsel %vm654, %v655, %v653
        %v657 = vclz %v656
        %v658 = vsub.s32 %v657, 2
        %vm659 = vcmp.gt.s32.totalorder 0, %v658
        %v660 = vsel %vm659, 0, %v658
        %v661 = vsub.s32 32, %v660
        %v662 = vshll.u32 %v653, %v660
        %v663 = vshrl.u32 %v645, %v661
        %v664 = vor.u32 %v662, %v663
        %v665 = vsub.s32 4294967266, %v660
        %v666 = vadd.s32 %v665, 127
        %v667 = vshll.u32 %v666, 23
        %v668 = vor.u32 4788187, %v667
        %v669 = vand.u32 2147483647, %v668
        %v671 = vcvt.s32.f32 %v664
        %v672 = vmul.f32 %v671, %v669
        %v673 = vxor.u32 %v672, 2147483648
        %v674 = vsel %vm591, %v673, %v672
        %v675 = vsub.s32 4, %v651
        %v676 = vsel %vm591, %v675, %v651
        %v677 = vsel %vm590, %v376, %v674
        %v678 = vsel %vm590, 0, %v676
        %v679 = vcosq.f32.pop %v677
        %v680 = vsinq.f32.pop %v677
        %vm681 = vweird.f32 %v376
        %v682 = vand.u32 %v678, 3
        %vm683 = vcmp.lt.s32.totalorder %v682, 2
        %vm684 = vcmp.eq.s32.totalorder %v682, 0
        %v685 = vxor.u32 %v680, 2147483648
        %v686 = vsel %vm684, %v679, %v685
        %vm687 = vcmp.eq.s32.totalorder %v682, 2
        %v688 = vxor.u32 %v679, 2147483648
        %v689 = vsel %vm687, %v688, %v680
        %v690 = vsel %vm683, %v686, %v689
        %v691 = vsel %vm681, nan, %v690
        %v692 = vand.u32 2147483647, %v377
        %vm693 = vcmp.le.f32.partialorder %v692, 0.7853982
        %vm694 = vcmp.lt.s32.totalorder %v377, 0
        %v695 = vand.u32 %v377, 2139095040
        %v696 = vshrl.u32 %v695, 23
        %v697 = vsub.s32 %v696, 127
        %v698 = vand.u32 2147483647, %v377
        %v699 = vand.u32 %v698, 8388607
        %v700 = vor.u32 %v699, 8388608
        %v701 = vsub.s32 0, %v700
        %v702 = vadd.s32 %v697, 1
        %vm703 = vcmp.gt.s32.totalorder %v702, 0
        %v704 = vsel %vm703, %v702, 0
        %v705 = vshrl.u32 %v704, 5
        %v706 = vand.u32 %v704, 31
        %v707 = vsub.s32 32, %v706
        %v708 = vshrl.u32 683565275, %v707
        %v709 = vshll.u32 683565275, %v706
        %v710 = vshrl.u32 2475754826, %v707
        %v711 = vor.u32 %v709, %v710
        %v712 = vshll.u32 2475754826, %v706
        %v713 = vshrl.u32 2131351028, %v707
        %v714 = vor.u32 %v712, %v713
        %v715 = vshll.u32 2131351028, %v706
        %v716 = vshrl.u32 2102212464, %v707
        %v717 = vor.u32 %v715, %v716
        %v718 = vshll.u32 2102212464, %v706
        %v719 = vshrl.u32 920167782, %v707
        %v720 = vor.u32 %v718, %v719
        %v721 = vshll.u32 920167782, %v706
        %v722 = vshrl.u32 1326507024, %v707
        %v723 = vor.u32 %v721, %v722
        %vm724 = vcmp.lt.s32.totalorder %v705, 1
        %vm725 = vcmp.lt.s32.totalorder %v705, 2
        %vm726 = vcmp.lt.s32.totalorder %v705, 3
        %vm727 = vcmp.lt.s32.totalorder %v705, 4
        %v728 = vsel %vm724, %v708, %v711
        %v729 = vsel %vm727, %v717, 2102212464
        %v730 = vsel %vm726, %v714, %v729
        %v731 = vsel %vm725, %v728, %v730
        %v732 = vsel %vm724, %v711, %v714
        %v733 = vsel %vm727, %v720, 920167782
        %v734 = vsel %vm726, %v717, %v733
        %v735 = vsel %vm725, %v732, %v734
        %v736 = vsel %vm724, %v714, %v717
        %v737 = vsel %vm727, %v723, 1326507024
        %v738 = vsel %vm726, %v720, %v737
        %v739 = vsel %vm725, %v736, %v738
        %v740 = vshll.u32 %v700, 8
        %v741 = vmul.u32.u64.compose %v740, %v739
        %v742 = vextract.low.u32 %v741
        %v743 = vextract.high.u32 %v741
        %v744 = vmul.u32.u64.compose %v740, %v735
        %v745 = vextract.low.u32 %v744
        %v746 = vextract.high.u32 %v744
        %v747 = vmul.u32 %v740, %v731
        %v748 = vadd.s32 %v743, %v745
        %vm749 = vc.u32 %v743, %v745
        %v750 = vadd.s32 %v746, 1
        %v751 = vsel %vm749, %v750, %v746
        %v752 = vadd.s32 %v747, %v751
        %v753 = vadd.s32 %v752, 536870912
        %v754 = vshrl.u32 %v753, 30
        %v755 = vshll.u32 %v754, 30
        %v756 = vsub.s32 %v752, %v755
        %vm757 = vcmp.lt.s32.totalorder %v756, 0
        %v758 = vsub.s32 0, %v756
        %v759 = vsel %vm757, %v758, %v756
        %v760 = vclz %v759
        %v761 = vsub.s32 %v760, 2
        %vm762 = vcmp.gt.s32.totalorder 0, %v761
        %v763 = vsel %vm762, 0, %v761
        %v764 = vsub.s32 32, %v763
        %v765 = vshll.u32 %v756, %v763
        %v766 = vshrl.u32 %v748, %v764
        %v767 = vor.u32 %v765, %v766
        %v768 = vsub.s32 4294967266, %v763
        %v769 = vadd.s32 %v768, 127
        %v770 = vshll.u32 %v769, 23
        %v771 = vor.u32 4788187, %v770
        %v772 = vand.u32 2147483647, %v771
        %v774 = vcvt.s32.f32 %v767
        %v775 = vmul.f32 %v774, %v772
        %v776 = vxor.u32 %v775, 2147483648
        %v777 = vsel %vm694, %v776, %v775
        %v778 = vsub.s32 4, %v754
        %v779 = vsel %vm694, %v778, %v754
        %v780 = vsel %vm693, %v377, %v777
        %v781 = vsel %vm693, 0, %v779
        %v782 = vcosq.f32.pop %v780
        %v783 = vsinq.f32.pop %v780
        %vm784 = vweird.f32 %v377
        %v785 = vand.u32 %v781, 3
        %vm786 = vcmp.lt.s32.totalorder %v785, 2
        %vm787 = vcmp.eq.s32.totalorder %v785, 0
        %v788 = vxor.u32 %v783, 2147483648
        %v789 = vsel %vm787, %v782, %v788
        %vm790 = vcmp.eq.s32.totalorder %v785, 2
        %v791 = vxor.u32 %v782, 2147483648
        %v792 = vsel %vm790, %v791, %v783
        %v793 = vsel %vm786, %v789, %v792
        %v794 = vsel %vm784, nan, %v793
        %vm795 = vcmask 23568
        %796 = vst.msk [vmem:[%s331] sm:$0xff] %vm795, %v485
        %797 = vst.msk [vmem:[%s331 + $0x8] sm:$0xff] %vm795, %v588
        %798 = vst.msk [vmem:[%s331 + $0x10] sm:$0xff] %vm795, %v691
        %799 = vst.msk [vmem:[%s331 + $0x18] sm:$0xff] %vm795, %v794
        %v800 = vand.u32 2147483647, %v374
        %vm801 = vcmp.le.f32.partialorder %v800, 0.7853982
        %vm802 = vcmp.lt.s32.totalorder %v374, 0
        %v803 = vand.u32 %v374, 2139095040
        %v804 = vshrl.u32 %v803, 23
        %v805 = vsub.s32 %v804, 127
        %v806 = vand.u32 2147483647, %v374
        %v807 = vand.u32 %v806, 8388607
        %v808 = vor.u32 %v807, 8388608
        %v809 = vsub.s32 0, %v808
        %v810 = vadd.s32 %v805, 1
        %vm811 = vcmp.gt.s32.totalorder %v810, 0
        %v812 = vsel %vm811, %v810, 0
        %v813 = vshrl.u32 %v812, 5
        %v814 = vand.u32 %v812, 31
        %v815 = vsub.s32 32, %v814
        %v816 = vshrl.u32 683565275, %v815
        %v817 = vshll.u32 683565275, %v814
        %v818 = vshrl.u32 2475754826, %v815
        %v819 = vor.u32 %v817, %v818
        %v820 = vshll.u32 2475754826, %v814
        %v821 = vshrl.u32 2131351028, %v815
        %v822 = vor.u32 %v820, %v821
        %v823 = vshll.u32 2131351028, %v814
        %v824 = vshrl.u32 2102212464, %v815
        %v825 = vor.u32 %v823, %v824
        %v826 = vshll.u32 2102212464, %v814
        %v827 = vshrl.u32 920167782, %v815
        %v828 = vor.u32 %v826, %v827
        %v829 = vshll.u32 920167782, %v814
        %v830 = vshrl.u32 1326507024, %v815
        %v831 = vor.u32 %v829, %v830
        %vm832 = vcmp.lt.s32.totalorder %v813, 1
        %vm833 = vcmp.lt.s32.totalorder %v813, 2
        %vm834 = vcmp.lt.s32.totalorder %v813, 3
        %vm835 = vcmp.lt.s32.totalorder %v813, 4
        %v836 = vsel %vm832, %v816, %v819
        %v837 = vsel %vm835, %v825, 2102212464
        %v838 = vsel %vm834, %v822, %v837
        %v839 = vsel %vm833, %v836, %v838
        %v840 = vsel %vm832, %v819, %v822
        %v841 = vsel %vm835, %v828, 920167782
        %v842 = vsel %vm834, %v825, %v841
        %v843 = vsel %vm833, %v840, %v842
        %v844 = vsel %vm832, %v822, %v825
        %v845 = vsel %vm835, %v831, 1326507024
        %v846 = vsel %vm834, %v828, %v845
        %v847 = vsel %vm833, %v844, %v846
        %v848 = vshll.u32 %v808, 8
        %v849 = vmul.u32.u64.compose %v848, %v847
        %v850 = vextract.low.u32 %v849
        %v851 = vextract.high.u32 %v849
        %v852 = vmul.u32.u64.compose %v848, %v843
        %v853 = vextract.low.u32 %v852
        %v854 = vextract.high.u32 %v852
        %v855 = vmul.u32 %v848, %v839
        %v856 = vadd.s32 %v851, %v853
        %vm857 = vc.u32 %v851, %v853
        %v858 = vadd.s32 %v854, 1
        %v859 = vsel %vm857, %v858, %v854
        %v860 = vadd.s32 %v855, %v859
        %v861 = vadd.s32 %v860, 536870912
        %v862 = vshrl.u32 %v861, 30
        %v863 = vshll.u32 %v862, 30
        %v864 = vsub.s32 %v860, %v863
        %vm865 = vcmp.lt.s32.totalorder %v864, 0
        %v866 = vsub.s32 0, %v864
        %v867 = vsel %vm865, %v866, %v864
        %v868 = vclz %v867
        %v869 = vsub.s32 %v868, 2
        %vm870 = vcmp.gt.s32.totalorder 0, %v869
        %v871 = vsel %vm870, 0, %v869
        %v872 = vsub.s32 32, %v871
        %v873 = vshll.u32 %v864, %v871
        %v874 = vshrl.u32 %v856, %v872
        %v875 = vor.u32 %v873, %v874
        %v876 = vsub.s32 4294967266, %v871
        %v877 = vadd.s32 %v876, 127
        %v878 = vshll.u32 %v877, 23
        %v879 = vor.u32 4788187, %v878
        %v880 = vand.u32 2147483647, %v879
        %v882 = vcvt.s32.f32 %v875
        %v883 = vmul.f32 %v882, %v880
        %v884 = vxor.u32 %v883, 2147483648
        %v885 = vsel %vm802, %v884, %v883
        %v886 = vsub.s32 4, %v862
        %v887 = vsel %vm802, %v886, %v862
        %v888 = vsel %vm801, %v374, %v885
        %v889 = vsel %vm801, 0, %v887
        %v890 = vcosq.f32.pop %v888
        %v891 = vsinq.f32.pop %v888
        %vm892 = vweird.f32 %v374
        %v893 = vadd.s32 %v889, 3
        %v894 = vand.u32 %v893, 3
        %vm895 = vcmp.lt.s32.totalorder %v894, 2
        %vm896 = vcmp.eq.s32.totalorder %v894, 0
        %v897 = vxor.u32 %v891, 2147483648
        %v898 = vsel %vm896, %v890, %v897
        %vm899 = vcmp.eq.s32.totalorder %v894, 2
        %v900 = vxor.u32 %v890, 2147483648
        %v901 = vsel %vm899, %v900, %v891
        %v902 = vsel %vm895, %v898, %v901
        %v903 = vsel %vm892, nan, %v902
        %v904 = vand.u32 2147483647, %v375
        %vm905 = vcmp.le.f32.partialorder %v904, 0.7853982
        %vm906 = vcmp.lt.s32.totalorder %v375, 0
        %v907 = vand.u32 %v375, 2139095040
        %v908 = vshrl.u32 %v907, 23
        %v909 = vsub.s32 %v908, 127
        %v910 = vand.u32 2147483647, %v375
        %v911 = vand.u32 %v910, 8388607
        %v912 = vor.u32 %v911, 8388608
        %v913 = vsub.s32 0, %v912
        %v914 = vadd.s32 %v909, 1
        %vm915 = vcmp.gt.s32.totalorder %v914, 0
        %v916 = vsel %vm915, %v914, 0
        %v917 = vshrl.u32 %v916, 5
        %v918 = vand.u32 %v916, 31
        %v919 = vsub.s32 32, %v918
        %v920 = vshrl.u32 683565275, %v919
        %v921 = vshll.u32 683565275, %v918
        %v922 = vshrl.u32 2475754826, %v919
        %v923 = vor.u32 %v921, %v922
        %v924 = vshll.u32 2475754826, %v918
        %v925 = vshrl.u32 2131351028, %v919
        %v926 = vor.u32 %v924, %v925
        %v927 = vshll.u32 2131351028, %v918
        %v928 = vshrl.u32 2102212464, %v919
        %v929 = vor.u32 %v927, %v928
        %v930 = vshll.u32 2102212464, %v918
        %v931 = vshrl.u32 920167782, %v919
        %v932 = vor.u32 %v930, %v931
        %v933 = vshll.u32 920167782, %v918
        %v934 = vshrl.u32 1326507024, %v919
        %v935 = vor.u32 %v933, %v934
        %vm936 = vcmp.lt.s32.totalorder %v917, 1
        %vm937 = vcmp.lt.s32.totalorder %v917, 2
        %vm938 = vcmp.lt.s32.totalorder %v917, 3
        %vm939 = vcmp.lt.s32.totalorder %v917, 4
        %v940 = vsel %vm936, %v920, %v923
        %v941 = vsel %vm939, %v929, 2102212464
        %v942 = vsel %vm938, %v926, %v941
        %v943 = vsel %vm937, %v940, %v942
        %v944 = vsel %vm936, %v923, %v926
        %v945 = vsel %vm939, %v932, 920167782
        %v946 = vsel %vm938, %v929, %v945
        %v947 = vsel %vm937, %v944, %v946
        %v948 = vsel %vm936, %v926, %v929
        %v949 = vsel %vm939, %v935, 1326507024
        %v950 = vsel %vm938, %v932, %v949
        %v951 = vsel %vm937, %v948, %v950
        %v952 = vshll.u32 %v912, 8
        %v953 = vmul.u32.u64.compose %v952, %v951
        %v954 = vextract.low.u32 %v953
        %v955 = vextract.high.u32 %v953
        %v956 = vmul.u32.u64.compose %v952, %v947
        %v957 = vextract.low.u32 %v956
        %v958 = vextract.high.u32 %v956
        %v959 = vmul.u32 %v952, %v943
        %v960 = vadd.s32 %v955, %v957
        %vm961 = vc.u32 %v955, %v957
        %v962 = vadd.s32 %v958, 1
        %v963 = vsel %vm961, %v962, %v958
        %v964 = vadd.s32 %v959, %v963
        %v965 = vadd.s32 %v964, 536870912
        %v966 = vshrl.u32 %v965, 30
        %v967 = vshll.u32 %v966, 30
        %v968 = vsub.s32 %v964, %v967
        %vm969 = vcmp.lt.s32.totalorder %v968, 0
        %v970 = vsub.s32 0, %v968
        %v971 = vsel %vm969, %v970, %v968
        %v972 = vclz %v971
        %v973 = vsub.s32 %v972, 2
        %vm974 = vcmp.gt.s32.totalorder 0, %v973
        %v975 = vsel %vm974, 0, %v973
        %v976 = vsub.s32 32, %v975
        %v977 = vshll.u32 %v968, %v975
        %v978 = vshrl.u32 %v960, %v976
        %v979 = vor.u32 %v977, %v978
        %v980 = vsub.s32 4294967266, %v975
        %v981 = vadd.s32 %v980, 127
        %v982 = vshll.u32 %v981, 23
        %v983 = vor.u32 4788187, %v982
        %v984 = vand.u32 2147483647, %v983
        %v986 = vcvt.s32.f32 %v979
        %v987 = vmul.f32 %v986, %v984
        %v988 = vxor.u32 %v987, 2147483648
        %v989 = vsel %vm906, %v988, %v987
        %v990 = vsub.s32 4, %v966
        %v991 = vsel %vm906, %v990, %v966
        %v992 = vsel %vm905, %v375, %v989
        %v993 = vsel %vm905, 0, %v991
        %v994 = vcosq.f32.pop %v992
        %v995 = vsinq.f32.pop %v992
        %vm996 = vweird.f32 %v375
        %v997 = vadd.s32 %v993, 3
        %v998 = vand.u32 %v997, 3
        %vm999 = vcmp.lt.s32.totalorder %v998, 2
        %vm1000 = vcmp.eq.s32.totalorder %v998, 0
        %v1001 = vxor.u32 %v995, 2147483648
        %v1002 = vsel %vm1000, %v994, %v1001
        %vm1003 = vcmp.eq.s32.totalorder %v998, 2
        %v1004 = vxor.u32 %v994, 2147483648
        %v1005 = vsel %vm1003, %v1004, %v995
        %v1006 = vsel %vm999, %v1002, %v1005
        %v1007 = vsel %vm996, nan, %v1006
        %v1008 = vand.u32 2147483647, %v376
        %vm1009 = vcmp.le.f32.partialorder %v1008, 0.7853982
        %vm1010 = vcmp.lt.s32.totalorder %v376, 0
        %v1011 = vand.u32 %v376, 2139095040
        %v1012 = vshrl.u32 %v1011, 23
        %v1013 = vsub.s32 %v1012, 127
        %v1014 = vand.u32 2147483647, %v376
        %v1015 = vand.u32 %v1014, 8388607
        %v1016 = vor.u32 %v1015, 8388608
        %v1017 = vsub.s32 0, %v1016
        %v1018 = vadd.s32 %v1013, 1
        %vm1019 = vcmp.gt.s32.totalorder %v1018, 0
        %v1020 = vsel %vm1019, %v1018, 0
        %v1021 = vshrl.u32 %v1020, 5
        %v1022 = vand.u32 %v1020, 31
        %v1023 = vsub.s32 32, %v1022
        %v1024 = vshrl.u32 683565275, %v1023
        %v1025 = vshll.u32 683565275, %v1022
        %v1026 = vshrl.u32 2475754826, %v1023
        %v1027 = vor.u32 %v1025, %v1026
        %v1028 = vshll.u32 2475754826, %v1022
        %v1029 = vshrl.u32 2131351028, %v1023
        %v1030 = vor.u32 %v1028, %v1029
        %v1031 = vshll.u32 2131351028, %v1022
        %v1032 = vshrl.u32 2102212464, %v1023
        %v1033 = vor.u32 %v1031, %v1032
        %v1034 = vshll.u32 2102212464, %v1022
        %v1035 = vshrl.u32 920167782, %v1023
        %v1036 = vor.u32 %v1034, %v1035
        %v1037 = vshll.u32 920167782, %v1022
        %v1038 = vshrl.u32 1326507024, %v1023
        %v1039 = vor.u32 %v1037, %v1038
        %vm1040 = vcmp.lt.s32.totalorder %v1021, 1
        %vm1041 = vcmp.lt.s32.totalorder %v1021, 2
        %vm1042 = vcmp.lt.s32.totalorder %v1021, 3
        %vm1043 = vcmp.lt.s32.totalorder %v1021, 4
        %v1044 = vsel %vm1040, %v1024, %v1027
        %v1045 = vsel %vm1043, %v1033, 2102212464
        %v1046 = vsel %vm1042, %v1030, %v1045
        %v1047 = vsel %vm1041, %v1044, %v1046
        %v1048 = vsel %vm1040, %v1027, %v1030
        %v1049 = vsel %vm1043, %v1036, 920167782
        %v1050 = vsel %vm1042, %v1033, %v1049
        %v1051 = vsel %vm1041, %v1048, %v1050
        %v1052 = vsel %vm1040, %v1030, %v1033
        %v1053 = vsel %vm1043, %v1039, 1326507024
        %v1054 = vsel %vm1042, %v1036, %v1053
        %v1055 = vsel %vm1041, %v1052, %v1054
        %v1056 = vshll.u32 %v1016, 8
        %v1057 = vmul.u32.u64.compose %v1056, %v1055
        %v1058 = vextract.low.u32 %v1057
        %v1059 = vextract.high.u32 %v1057
        %v1060 = vmul.u32.u64.compose %v1056, %v1051
        %v1061 = vextract.low.u32 %v1060
        %v1062 = vextract.high.u32 %v1060
        %v1063 = vmul.u32 %v1056, %v1047
        %v1064 = vadd.s32 %v1059, %v1061
        %vm1065 = vc.u32 %v1059, %v1061
        %v1066 = vadd.s32 %v1062, 1
        %v1067 = vsel %vm1065, %v1066, %v1062
        %v1068 = vadd.s32 %v1063, %v1067
        %v1069 = vadd.s32 %v1068, 536870912
        %v1070 = vshrl.u32 %v1069, 30
        %v1071 = vshll.u32 %v1070, 30
        %v1072 = vsub.s32 %v1068, %v1071
        %vm1073 = vcmp.lt.s32.totalorder %v1072, 0
        %v1074 = vsub.s32 0, %v1072
        %v1075 = vsel %vm1073, %v1074, %v1072
        %v1076 = vclz %v1075
        %v1077 = vsub.s32 %v1076, 2
        %vm1078 = vcmp.gt.s32.totalorder 0, %v1077
        %v1079 = vsel %vm1078, 0, %v1077
        %v1080 = vsub.s32 32, %v1079
        %v1081 = vshll.u32 %v1072, %v1079
        %v1082 = vshrl.u32 %v1064, %v1080
        %v1083 = vor.u32 %v1081, %v1082
        %v1084 = vsub.s32 4294967266, %v1079
        %v1085 = vadd.s32 %v1084, 127
        %v1086 = vshll.u32 %v1085, 23
        %v1087 = vor.u32 4788187, %v1086
        %v1088 = vand.u32 2147483647, %v1087
        %v1090 = vcvt.s32.f32 %v1083
        %v1091 = vmul.f32 %v1090, %v1088
        %v1092 = vxor.u32 %v1091, 2147483648
        %v1093 = vsel %vm1010, %v1092, %v1091
        %v1094 = vsub.s32 4, %v1070
        %v1095 = vsel %vm1010, %v1094, %v1070
        %v1096 = vsel %vm1009, %v376, %v1093
        %v1097 = vsel %vm1009, 0, %v1095
        %v1098 = vcosq.f32.pop %v1096
        %v1099 = vsinq.f32.pop %v1096
        %vm1100 = vweird.f32 %v376
        %v1101 = vadd.s32 %v1097, 3
        %v1102 = vand.u32 %v1101, 3
        %vm1103 = vcmp.lt.s32.totalorder %v1102, 2
        %vm1104 = vcmp.eq.s32.totalorder %v1102, 0
        %v1105 = vxor.u32 %v1099, 2147483648
        %v1106 = vsel %vm1104, %v1098, %v1105
        %vm1107 = vcmp.eq.s32.totalorder %v1102, 2
        %v1108 = vxor.u32 %v1098, 2147483648
        %v1109 = vsel %vm1107, %v1108, %v1099
        %v1110 = vsel %vm1103, %v1106, %v1109
        %v1111 = vsel %vm1100, nan, %v1110
        %v1112 = vand.u32 2147483647, %v377
        %vm1113 = vcmp.le.f32.partialorder %v1112, 0.7853982
        %vm1114 = vcmp.lt.s32.totalorder %v377, 0
        %v1115 = vand.u32 %v377, 2139095040
        %v1116 = vshrl.u32 %v1115, 23
        %v1117 = vsub.s32 %v1116, 127
        %v1118 = vand.u32 2147483647, %v377
        %v1119 = vand.u32 %v1118, 8388607
        %v1120 = vor.u32 %v1119, 8388608
        %v1121 = vsub.s32 0, %v1120
        %v1122 = vadd.s32 %v1117, 1
        %vm1123 = vcmp.gt.s32.totalorder %v1122, 0
        %v1124 = vsel %vm1123, %v1122, 0
        %v1125 = vshrl.u32 %v1124, 5
        %v1126 = vand.u32 %v1124, 31
        %v1127 = vsub.s32 32, %v1126
        %v1128 = vshrl.u32 683565275, %v1127
        %v1129 = vshll.u32 683565275, %v1126
        %v1130 = vshrl.u32 2475754826, %v1127
        %v1131 = vor.u32 %v1129, %v1130
        %v1132 = vshll.u32 2475754826, %v1126
        %v1133 = vshrl.u32 2131351028, %v1127
        %v1134 = vor.u32 %v1132, %v1133
        %v1135 = vshll.u32 2131351028, %v1126
        %v1136 = vshrl.u32 2102212464, %v1127
        %v1137 = vor.u32 %v1135, %v1136
        %v1138 = vshll.u32 2102212464, %v1126
        %v1139 = vshrl.u32 920167782, %v1127
        %v1140 = vor.u32 %v1138, %v1139
        %v1141 = vshll.u32 920167782, %v1126
        %v1142 = vshrl.u32 1326507024, %v1127
        %v1143 = vor.u32 %v1141, %v1142
        %vm1144 = vcmp.lt.s32.totalorder %v1125, 1
        %vm1145 = vcmp.lt.s32.totalorder %v1125, 2
        %vm1146 = vcmp.lt.s32.totalorder %v1125, 3
        %vm1147 = vcmp.lt.s32.totalorder %v1125, 4
        %v1148 = vsel %vm1144, %v1128, %v1131
        %v1149 = vsel %vm1147, %v1137, 2102212464
        %v1150 = vsel %vm1146, %v1134, %v1149
        %v1151 = vsel %vm1145, %v1148, %v1150
        %v1152 = vsel %vm1144, %v1131, %v1134
        %v1153 = vsel %vm1147, %v1140, 920167782
        %v1154 = vsel %vm1146, %v1137, %v1153
        %v1155 = vsel %vm1145, %v1152, %v1154
        %v1156 = vsel %vm1144, %v1134, %v1137
        %v1157 = vsel %vm1147, %v1143, 1326507024
        %v1158 = vsel %vm1146, %v1140, %v1157
        %v1159 = vsel %vm1145, %v1156, %v1158
        %v1160 = vshll.u32 %v1120, 8
        %v1161 = vmul.u32.u64.compose %v1160, %v1159
        %v1162 = vextract.low.u32 %v1161
        %v1163 = vextract.high.u32 %v1161
        %v1164 = vmul.u32.u64.compose %v1160, %v1155
        %v1165 = vextract.low.u32 %v1164
        %v1166 = vextract.high.u32 %v1164
        %v1167 = vmul.u32 %v1160, %v1151
        %v1168 = vadd.s32 %v1163, %v1165
        %vm1169 = vc.u32 %v1163, %v1165
        %v1170 = vadd.s32 %v1166, 1
        %v1171 = vsel %vm1169, %v1170, %v1166
        %v1172 = vadd.s32 %v1167, %v1171
        %v1173 = vadd.s32 %v1172, 536870912
        %v1174 = vshrl.u32 %v1173, 30
        %v1175 = vshll.u32 %v1174, 30
        %v1176 = vsub.s32 %v1172, %v1175
        %vm1177 = vcmp.lt.s32.totalorder %v1176, 0
        %v1178 = vsub.s32 0, %v1176
        %v1179 = vsel %vm1177, %v1178, %v1176
        %v1180 = vclz %v1179
        %v1181 = vsub.s32 %v1180, 2
        %vm1182 = vcmp.gt.s32.totalorder 0, %v1181
        %v1183 = vsel %vm1182, 0, %v1181
        %v1184 = vsub.s32 32, %v1183
        %v1185 = vshll.u32 %v1176, %v1183
        %v1186 = vshrl.u32 %v1168, %v1184
        %v1187 = vor.u32 %v1185, %v1186
        %v1188 = vsub.s32 4294967266, %v1183
        %v1189 = vadd.s32 %v1188, 127
        %v1190 = vshll.u32 %v1189, 23
        %v1191 = vor.u32 4788187, %v1190
        %v1192 = vand.u32 2147483647, %v1191
        %v1194 = vcvt.s32.f32 %v1187
        %v1195 = vmul.f32 %v1194, %v1192
        %v1196 = vxor.u32 %v1195, 2147483648
        %v1197 = vsel %vm1114, %v1196, %v1195
        %v1198 = vsub.s32 4, %v1174
        %v1199 = vsel %vm1114, %v1198, %v1174
        %v1200 = vsel %vm1113, %v377, %v1197
        %v1201 = vsel %vm1113, 0, %v1199
        %v1202 = vcosq.f32.pop %v1200
        %v1203 = vsinq.f32.pop %v1200
        %vm1204 = vweird.f32 %v377
        %v1205 = vadd.s32 %v1201, 3
        %v1206 = vand.u32 %v1205, 3
        %vm1207 = vcmp.lt.s32.totalorder %v1206, 2
        %vm1208 = vcmp.eq.s32.totalorder %v1206, 0
        %v1209 = vxor.u32 %v1203, 2147483648
        %v1210 = vsel %vm1208, %v1202, %v1209
        %vm1211 = vcmp.eq.s32.totalorder %v1206, 2
        %v1212 = vxor.u32 %v1202, 2147483648
        %v1213 = vsel %vm1211, %v1212, %v1203
        %v1214 = vsel %vm1207, %v1210, %v1213
        %v1215 = vsel %vm1204, nan, %v1214
        %1220 = vrot.lane.b32.xlu0 %v903, 1
        %v1221 = vpop.permute.xlu0 %1220
        %1222 = vrot.lane.b32.xlu0 %v1007, 1
        %v1223 = vpop.permute.xlu0 %1222
        %1224 = vrot.lane.b32.xlu0 %v1111, 1
        %v1225 = vpop.permute.xlu0 %1224
        %1226 = vrot.lane.b32.xlu0 %v1215, 1
        %v1227 = vpop.permute.xlu0 %1226
        %vm1232 = vcmask 31768
        %1233 = vst.msk [vmem:[%s331] sm:$0xff] %vm1232, %v1221
        %1234 = vst.msk [vmem:[%s331 + $0x8] sm:$0xff] %vm1232, %v1223
        %1235 = vst.msk [vmem:[%s331 + $0x10] sm:$0xff] %vm1232, %v1225
        %1236 = vst.msk [vmem:[%s331 + $0x18] sm:$0xff] %vm1232, %v1227
        %1241 = vrot.lane.b32.xlu0 %v374, 1
        %v1242 = vpop.permute.xlu0 %1241
        %1243 = vrot.lane.b32.xlu0 %v375, 1
        %v1244 = vpop.permute.xlu0 %1243
        %1245 = vrot.lane.b32.xlu0 %v376, 1
        %v1246 = vpop.permute.xlu0 %1245
        %1247 = vrot.lane.b32.xlu0 %v377, 1
        %v1248 = vpop.permute.xlu0 %1247
        %vm1253 = vcmask 72736
        %1254 = vst.msk [vmem:[%s331] sm:$0xff] %vm1253, %v1242
        %1255 = vst.msk [vmem:[%s331 + $0x8] sm:$0xff] %vm1253, %v1244
        %1256 = vst.msk [vmem:[%s331 + $0x10] sm:$0xff] %vm1253, %v1246
        %1257 = vst.msk [vmem:[%s331 + $0x18] sm:$0xff] %vm1253, %v1248
        %v1258 = vld [vmem:[%s354] sm:$0x1]
        %v1259 = vld [vmem:[%s354 + $0x1] sm:$0x1]
        %v1260 = vld [vmem:[%s354 + $0x2] sm:$0x1]
        %v1261 = vld [vmem:[%s354 + $0x3] sm:$0x1]
        %v1266 = vlaneseq
        %v1267 = vshrl.u32 %v1266, 7
        %v1268 = vsub.s32 0, %v1267
        %v1269 = vrot.slane %v1258, %v1268
        %v1270 = vlaneseq
        %v1271 = vshrl.u32 %v1270, 7
        %v1272 = vsub.s32 0, %v1271
        %v1273 = vrot.slane %v1259, %v1272
        %v1274 = vlaneseq
        %v1275 = vshrl.u32 %v1274, 7
        %v1276 = vsub.s32 0, %v1275
        %v1277 = vrot.slane %v1260, %v1276
        %v1278 = vlaneseq
        %v1279 = vshrl.u32 %v1278, 7
        %v1280 = vsub.s32 0, %v1279
        %v1281 = vrot.slane %v1261, %v1280
        %1282 = vrot.lane.b32.xlu0 %v1269, 9
        %v1283 = vpop.permute.xlu0 %1282
        %1284 = vrot.lane.b32.xlu0 %v1273, 9
        %v1285 = vpop.permute.xlu0 %1284
        %1286 = vrot.lane.b32.xlu0 %v1277, 9
        %v1287 = vpop.permute.xlu0 %1286
        %1288 = vrot.lane.b32.xlu0 %v1281, 9
        %v1289 = vpop.permute.xlu0 %1288
        %vm1294 = vcmask 121928
        %1295 = vst.msk [vmem:[%s331] sm:$0xff] %vm1294, %v1283
        %1296 = vst.msk [vmem:[%s331 + $0x8] sm:$0xff] %vm1294, %v1285
        %1297 = vst.msk [vmem:[%s331 + $0x10] sm:$0xff] %vm1294, %v1287
        %1298 = vst.msk [vmem:[%s331 + $0x18] sm:$0xff] %vm1294, %v1289
        %v1299 = vlaneseq
        %v1300 = vshrl.u32 %v1299, 7
        %v1301 = vlaneseq
        %v1302 = vand.u32 %v1301, 127
        %vm1303 = vcmp.eq.s32.totalorder %v1300, %v1302
        %v1304 = vsel %vm1303, 1, 0
        %v1305 = vcvt.s32.f32 %v1304
        %1307 = vrot.lane.b32.xlu0 %v1305, 15
        %v1308 = vpop.permute.xlu0 %1307
        %vm1310 = vcmask 187512
        %1311 = vst.msk [vmem:[%s331] sm:$0xff] %vm1310, %v1308
        %1312 = vst.msk [vmem:[%s331 + $0x8] sm:$0xff] %vm1310, %v1308
        %1313 = vst.msk [vmem:[%s331 + $0x10] sm:$0xff] %vm1310, %v1308
        %1314 = vst.msk [vmem:[%s331 + $0x18] sm:$0xff] %vm1310, %v1308
        %v1315 = vld [vmem:[%s359] sm:$0xff]
        %v1316 = vld [vmem:[%s359 + $0x8] sm:$0xff]
        %v1317 = vld [vmem:[%s359 + $0x10] sm:$0xff]
        %v1318 = vld [vmem:[%s359 + $0x18] sm:$0xff]
        %v1319 = vld [vmem:[%s359 + $0x20] sm:$0xff]
        %v1320 = vld [vmem:[%s359 + $0x28] sm:$0xff]
        %v1321 = vld [vmem:[%s359 + $0x30] sm:$0xff]
        %v1322 = vld [vmem:[%s359 + $0x38] sm:$0xff]
        %v1323 = vld [vmem:[%s359 + $0x40] sm:$0xff]
        %v1324 = vld [vmem:[%s359 + $0x48] sm:$0xff]
        %v1325 = vld [vmem:[%s359 + $0x50] sm:$0xff]
        %v1326 = vld [vmem:[%s359 + $0x58] sm:$0xff]
        %vm1327 = vcmask 31744
        %1328 = vst.msk [vmem:[%s338] sm:$0xff] %vm1327, %v1315
        %1329 = vst.msk [vmem:[%s338 + $0x8] sm:$0xff] %vm1327, %v1316
        %1330 = vst.msk [vmem:[%s338 + $0x10] sm:$0xff] %vm1327, %v1317
        %1331 = vst.msk [vmem:[%s338 + $0x18] sm:$0xff] %vm1327, %v1318
        %1332 = vst.msk [vmem:[%s338 + $0x20] sm:$0xff] %vm1327, %v1319
        %1333 = vst.msk [vmem:[%s338 + $0x28] sm:$0xff] %vm1327, %v1320
        %1334 = vst.msk [vmem:[%s338 + $0x30] sm:$0xff] %vm1327, %v1321
        %1335 = vst.msk [vmem:[%s338 + $0x38] sm:$0xff] %vm1327, %v1322
        %1336 = vst.msk [vmem:[%s338 + $0x40] sm:$0xff] %vm1327, %v1323
        %1337 = vst.msk [vmem:[%s338 + $0x48] sm:$0xff] %vm1327, %v1324
        %1338 = vst.msk [vmem:[%s338 + $0x50] sm:$0xff] %vm1327, %v1325
        %1339 = vst.msk [vmem:[%s338 + $0x58] sm:$0xff] %vm1327, %v1326
        %v1340 = vld [vmem:[%s363] sm:$0x1]
        %v1341 = vld [vmem:[%s363 + $0x1] sm:$0x1]
        %v1342 = vld [vmem:[%s363 + $0x2] sm:$0x1]
        %v1343 = vld [vmem:[%s363 + $0x3] sm:$0x1]
        %v1344 = vld [vmem:[%s363 + $0x4] sm:$0x1]
        %v1345 = vld [vmem:[%s363 + $0x5] sm:$0x1]
        %v1352 = vlaneseq
        %v1353 = vshrl.u32 %v1352, 7
        %v1354 = vsub.s32 0, %v1353
        %v1355 = vrot.slane %v1340, %v1354
        %v1356 = vlaneseq
        %v1357 = vshrl.u32 %v1356, 7
        %v1358 = vsub.s32 0, %v1357
        %v1359 = vrot.slane %v1341, %v1358
        %v1360 = vlaneseq
        %v1361 = vshrl.u32 %v1360, 7
        %v1362 = vsub.s32 0, %v1361
        %v1363 = vrot.slane %v1342, %v1362
        %v1364 = vlaneseq
        %v1365 = vshrl.u32 %v1364, 7
        %v1366 = vsub.s32 0, %v1365
        %v1367 = vrot.slane %v1343, %v1366
        %v1368 = vlaneseq
        %v1369 = vshrl.u32 %v1368, 7
        %v1370 = vsub.s32 0, %v1369
        %v1371 = vrot.slane %v1344, %v1370
        %v1372 = vlaneseq
        %v1373 = vshrl.u32 %v1372, 7
        %v1374 = vsub.s32 0, %v1373
        %v1375 = vrot.slane %v1345, %v1374
        %1376 = vrot.lane.b32.xlu0 %v1355, 4
        %v1377 = vpop.permute.xlu0 %1376
        %1378 = vrot.lane.b32.xlu0 %v1359, 4
        %v1379 = vpop.permute.xlu0 %1378
        %1380 = vrot.lane.b32.xlu0 %v1363, 4
        %v1381 = vpop.permute.xlu0 %1380
        %1382 = vrot.lane.b32.xlu0 %v1367, 4
        %v1383 = vpop.permute.xlu0 %1382
        %1384 = vrot.lane.b32.xlu0 %v1371, 4
        %v1385 = vpop.permute.xlu0 %1384
        %1386 = vrot.lane.b32.xlu0 %v1375, 4
        %v1387 = vpop.permute.xlu0 %1386
        %vm1394 = vcmask 121888
        %1395 = vst.msk [vmem:[%s338] sm:$0xff] %vm1394, %v1377
        %1396 = vst.msk [vmem:[%s338 + $0x8] sm:$0xff] %vm1394, %v1377
        %1397 = vst.msk [vmem:[%s338 + $0x10] sm:$0xff] %vm1394, %v1379
        %1398 = vst.msk [vmem:[%s338 + $0x18] sm:$0xff] %vm1394, %v1379
        %1399 = vst.msk [vmem:[%s338 + $0x20] sm:$0xff] %vm1394, %v1381
        %1400 = vst.msk [vmem:[%s338 + $0x28] sm:$0xff] %vm1394, %v1381
        %1401 = vst.msk [vmem:[%s338 + $0x30] sm:$0xff] %vm1394, %v1383
        %1402 = vst.msk [vmem:[%s338 + $0x38] sm:$0xff] %vm1394, %v1383
        %1403 = vst.msk [vmem:[%s338 + $0x40] sm:$0xff] %vm1394, %v1385
        %1404 = vst.msk [vmem:[%s338 + $0x48] sm:$0xff] %vm1394, %v1385
        %1405 = vst.msk [vmem:[%s338 + $0x50] sm:$0xff] %vm1394, %v1387
        %1406 = vst.msk [vmem:[%s338 + $0x58] sm:$0xff] %vm1394, %v1387
        %v1407 = vadd.s32 %v1300, 8
        %vm1408 = vcmp.eq.s32.totalorder %v1407, %v1302
        %v1409 = vsel %vm1408, 1, 0
        %v1410 = vcvt.s32.f32 %v1409
        %1412 = vrot.lane.b32.xlu0 %v1410, 15
        %v1413 = vpop.permute.xlu0 %1412
        %vm1415 = vcmask 253048
        %1416 = vst.msk [vmem:[%s338] sm:$0xff] %vm1415, %v1308
        %1417 = vst.msk [vmem:[%s338 + $0x8] sm:$0xff] %vm1415, %v1413
        %1418 = vst.msk [vmem:[%s338 + $0x10] sm:$0xff] %vm1415, %v1308
        %1419 = vst.msk [vmem:[%s338 + $0x18] sm:$0xff] %vm1415, %v1413
        %1420 = vst.msk [vmem:[%s338 + $0x20] sm:$0xff] %vm1415, %v1308
        %1421 = vst.msk [vmem:[%s338 + $0x28] sm:$0xff] %vm1415, %v1413
        %1422 = vst.msk [vmem:[%s338 + $0x30] sm:$0xff] %vm1415, %v1308
        %1423 = vst.msk [vmem:[%s338 + $0x38] sm:$0xff] %vm1415, %v1413
        %1424 = vst.msk [vmem:[%s338 + $0x40] sm:$0xff] %vm1415, %v1308
        %1425 = vst.msk [vmem:[%s338 + $0x48] sm:$0xff] %vm1415, %v1413
        %1426 = vst.msk [vmem:[%s338 + $0x50] sm:$0xff] %vm1415, %v1308
        %1427 = vst.msk [vmem:[%s338 + $0x58] sm:$0xff] %vm1415, %v1413
        %v1428 = vld [vmem:[%s368] sm:$0x1f]
        %v1429 = vld [vmem:[%s368 + $0x8] sm:$0x1f]
        %v1430 = vld [vmem:[%s368 + $0x10] sm:$0x1f]
        %v1431 = vld [vmem:[%s368 + $0x18] sm:$0x1f]
        %v1432 = vld [vmem:[%s368 + $0x20] sm:$0x1f]
        %v1433 = vld [vmem:[%s368 + $0x28] sm:$0x1f]
        %v1434 = vld [vmem:[%s368 + $0x30] sm:$0x1f]
        %v1435 = vld [vmem:[%s368 + $0x38] sm:$0x1f]
        %vm1436 = vcmask 69632
        %1437 = vst.msk [vmem:[%s373] sm:$0x1f] %vm1436, %v1428
        %1438 = vst.msk [vmem:[%s373 + $0x8] sm:$0x1f] %vm1436, %v1429
        %1439 = vst.msk [vmem:[%s373 + $0x10] sm:$0x1f] %vm1436, %v1430
        %1440 = vst.msk [vmem:[%s373 + $0x18] sm:$0x1f] %vm1436, %v1431
        %1441 = vst.msk [vmem:[%s373 + $0x20] sm:$0x1f] %vm1436, %v1432
        %1442 = vst.msk [vmem:[%s373 + $0x28] sm:$0x1f] %vm1436, %v1433
        %1443 = vst.msk [vmem:[%s373 + $0x30] sm:$0x1f] %vm1436, %v1434
        %1444 = vst.msk [vmem:[%s373 + $0x38] sm:$0x1f] %vm1436, %v1435
        %vm1445 = vcmp.eq.s32.totalorder %v1302, 0
        %vm1446 = vcmp.eq.s32.totalorder %v1302, 1
        %vm1447 = vcmp.eq.s32.totalorder %v1302, 2
        %vm1448 = vcmp.eq.s32.totalorder %v1302, 3
        %vm1449 = vcmp.eq.s32.totalorder %v1302, 4
        %vm1450 = vcmp.eq.s32.totalorder %v1302, 5
        %vm1451 = vcmp.eq.s32.totalorder %v1302, 6
        %vm1452 = vcmp.eq.s32.totalorder %v1302, 7
        %v1453 = vsel %vm1445, 1, 0
        %v1454 = vsel %vm1446, 1, 0
        %v1455 = vsel %vm1447, 1, 0
        %v1456 = vsel %vm1448, 1, 0
        %v1457 = vsel %vm1449, 1, 0
        %v1458 = vsel %vm1450, 1, 0
        %v1459 = vsel %vm1451, 1, 0
        %v1460 = vsel %vm1452, 1, 0
        %v1461 = vcvt.s32.f32 %v1453
        %v1462 = vcvt.s32.f32 %v1454
        %v1463 = vcvt.s32.f32 %v1455
        %v1464 = vcvt.s32.f32 %v1456
        %v1465 = vcvt.s32.f32 %v1457
        %v1466 = vcvt.s32.f32 %v1458
        %v1467 = vcvt.s32.f32 %v1459
        %v1468 = vcvt.s32.f32 %v1460
        %1477 = vrot.lane.b32.xlu0 %v1461, 9
        %v1478 = vpop.permute.xlu0 %1477
        %1479 = vrot.lane.b32.xlu0 %v1462, 9
        %v1480 = vpop.permute.xlu0 %1479
        %1481 = vrot.lane.b32.xlu0 %v1463, 9
        %v1482 = vpop.permute.xlu0 %1481
        %1483 = vrot.lane.b32.xlu0 %v1464, 9
        %v1484 = vpop.permute.xlu0 %1483
        %1485 = vrot.lane.b32.xlu0 %v1465, 9
        %v1486 = vpop.permute.xlu0 %1485
        %1487 = vrot.lane.b32.xlu0 %v1466, 9
        %v1488 = vpop.permute.xlu0 %1487
        %1489 = vrot.lane.b32.xlu0 %v1467, 9
        %v1490 = vpop.permute.xlu0 %1489
        %1491 = vrot.lane.b32.xlu0 %v1468, 9
        %v1492 = vpop.permute.xlu0 %1491
        %vm1501 = vcmask 135240
        %1502 = vst.msk [vmem:[%s373] sm:$0x1f] %vm1501, %v1478
        %1503 = vst.msk [vmem:[%s373 + $0x8] sm:$0x1f] %vm1501, %v1480
        %1504 = vst.msk [vmem:[%s373 + $0x10] sm:$0x1f] %vm1501, %v1482
        %1505 = vst.msk [vmem:[%s373 + $0x18] sm:$0x1f] %vm1501, %v1484
        %1506 = vst.msk [vmem:[%s373 + $0x20] sm:$0x1f] %vm1501, %v1486
        %1507 = vst.msk [vmem:[%s373 + $0x28] sm:$0x1f] %vm1501, %v1488
        %1508 = vst.msk [vmem:[%s373 + $0x30] sm:$0x1f] %vm1501, %v1490
        %1509 = vst.msk [vmem:[%s373 + $0x38] sm:$0x1f] %vm1501, %v1492
        %s1510 = sand.u32 %s163, 1
        %s1511 = scalar_lea.sflag [#allocation3], %s1510
        %s1512 = sand.u32 %s163, 1
        %s1513 = smul.addr %s1512, 32
        %s1514 = scalar_lea.vmem [#allocation2], %s1513
        %s1515 = sand.u32 %s189, 1
        %s1516 = scalar_lea.sflag [#allocation5], %s1515
        %s1517 = sand.u32 %s189, 1
        %s1518 = smul.addr %s1517, 96
        %s1519 = scalar_lea.vmem [#allocation4], %s1518
        %p1520 = scmp.lt.s32.totalorder %s25, 1
        %s1521 = scalar_select %p1520, %s25, 1
        %s1522 = smul.addr %s1521, 8
        %s1523 = smul.addr %s1522, 8
        %s1524 = scalar_lea.vmem %s7, %s1523
        // Predicated region
        $region41: #{_pack_and_compute.1} parent=39 // pred_check
          %p1525 = pneg %p173
        $region42: #{_pack_and_compute.1} parent=39 // pred_check_branch
          %1527 = sbr.rel (%p1525) target = $region44
        $region43: #{_pack_and_compute.1} parent=39 // pred_region
          %s1529 = ssub.s32 512, 512
          %1530 = vsyncadd %s1511, %s1529
          %s1531 = smul.addr %s25, 4
          %s1532 = smul.addr %s1531, 128
          %s1533 = scalar_lea.hbm %s5, %s1532
          %s1534 = sshll.u32 %s1514, 4
          %s1535 = int_to_ptr.vmem [resolvable:$true] %s1534
          %1540 = dma.vmem_to_hbm [thread:$0]  %s1535, 512, %s1533, %s1511, 128, 128, 8
        $region44: #{_pack_and_compute.1} parent=39 // pred_fallthru
          _
        // Predicated region
        $region45: #{_pack_and_compute.1} parent=39 // pred_check
          %p1541 = pneg %p199
        $region46: #{_pack_and_compute.1} parent=39 // pred_check_branch
          %1543 = sbr.rel (%p1541) target = $region48
        $region47: #{_pack_and_compute.1} parent=39 // pred_region
          %s1545 = ssub.s32 1536, 1536
          %1546 = vsyncadd %s1516, %s1545
          %s1547 = smul.addr %s25, 12
          %s1548 = smul.addr %s1547, 128
          %s1549 = scalar_lea.hbm %s6, %s1548
          %s1550 = sshll.u32 %s1519, 4
          %s1551 = int_to_ptr.vmem [resolvable:$true] %s1550
          %1556 = dma.vmem_to_hbm [thread:$0]  %s1551, 1536, %s1549, %s1516, 128, 128, 8
        $region48: #{_pack_and_compute.1} parent=39 // pred_fallthru
          _
        // Predicated region
        $region49: #{_pack_and_compute.1} parent=39 // pred_check
          %p1557 = pneg %p225
        $region50: #{_pack_and_compute.1} parent=39 // pred_check_branch
          %1559 = sbr.rel (%p1557) target = $region52
        $region51: #{_pack_and_compute.1} parent=39 // pred_region
          _
        $region52: #{_pack_and_compute.1} parent=39 // pred_fallthru
          _
      $region40: #{_pack_and_compute.1} parent=5 // pred_fallthru
        _
      %p1560 = scmp.le.s32.totalorder 2, %s20
      // Predicated region
      $region53: #{_pack_and_compute.1} parent=5 // pred_check
        %p1561 = pneg %p1560
      $region54: #{_pack_and_compute.1} parent=5 // pred_check_branch
        %1563 = sbr.rel (%p1561) target = $region56
      $region55: #{_pack_and_compute.1} parent=5 // pred_region
        %s1564 = ssub.s32 %s20, 2
        // Predicated region
        $region57: #{_pack_and_compute.1} parent=55 // pred_check
          %p1565 = pneg %p179
        $region58: #{_pack_and_compute.1} parent=55 // pred_check_branch
          %1567 = sbr.rel (%p1565) target = $region60
        $region59: #{_pack_and_compute.1} parent=55 // pred_region
          %s1568 = sand.u32 %s164, 1
          %s1569 = scalar_lea.sflag [#allocation3], %s1568
          %s1570 = sand.u32 %s164, 1
          %s1571 = smul.addr %s1570, 32
          %s1572 = scalar_lea.vmem [#allocation2], %s1571
          %1573 = dma.done %s1569, 512
        $region60: #{_pack_and_compute.1} parent=55 // pred_fallthru
          _
        // Predicated region
        $region61: #{_pack_and_compute.1} parent=55 // pred_check
          %p1574 = pneg %p205
        $region62: #{_pack_and_compute.1} parent=55 // pred_check_branch
          %1576 = sbr.rel (%p1574) target = $region64
        $region63: #{_pack_and_compute.1} parent=55 // pred_region
          %s1577 = sand.u32 %s190, 1
          %s1578 = scalar_lea.sflag [#allocation5], %s1577
          %s1579 = sand.u32 %s190, 1
          %s1580 = smul.addr %s1579, 96
          %s1581 = scalar_lea.vmem [#allocation4], %s1580
          %1582 = dma.done %s1578, 1536
        $region64: #{_pack_and_compute.1} parent=55 // pred_fallthru
          _
        // Predicated region
        $region65: #{_pack_and_compute.1} parent=55 // pred_check
          %p1583 = pneg %p231
        $region66: #{_pack_and_compute.1} parent=55 // pred_check_branch
          %1585 = sbr.rel (%p1583) target = $region68
        $region67: #{_pack_and_compute.1} parent=55 // pred_region
          %p1586 = scmp.lt.s32.totalorder %s26, 1
          %s1587 = scalar_select %p1586, %s26, 1
          %s1588 = smul.addr %s1587, 8
          %s1589 = smul.addr %s1588, 8
          %s1590 = scalar_lea.vmem %s7, %s1589
        $region68: #{_pack_and_compute.1} parent=55 // pred_fallthru
          _
      $region56: #{_pack_and_compute.1} parent=5 // pred_fallthru
        _
    $region6: #{_pack_and_compute.1} parent=1 // loop_footer
      %s24 = sadd.s32 1, %s20
    $region7: #{_pack_and_compute.1} parent=1 // loop_footer_branch
      %19 = sbr.rel target = $region3
    $region8: #{_pack_and_compute.1} parent=1 // loop_exit
      _
    %1591 = vsyncpa [#allocation3], 1
    %s1592 = scalar_lea.sflag [#allocation3], 1
    %1593 = vsyncpa %s1592, 1
    %1594 = vsyncpa [#allocation5], 1
    %s1595 = scalar_lea.sflag [#allocation5], 1
    %1596 = vsyncpa %s1595, 1

</llo_original>
